<compile_context>
chip_gen: v7x
topology: tpu7x:2x2x1
jax: 0.10.0
libtpu: 0.0.40
codegen_flags: <defaults>
</compile_context>

<pallas_src>
import functools

import numpy as np
import jax
import jax.numpy as jnp
from jax.experimental import pallas as pl
from jax.experimental.pallas import tpu as pltpu


def _round_up(x, m):
    return ((x + m - 1) // m) * m


# ----------------------------------------------------------------------------
# Sweep 1: matmul + bias, accumulate per-channel sum / sum-of-squares.
# ----------------------------------------------------------------------------
def _make_matmul_stats_kernel(ts, s_valid):
    needs_mask = (s_valid % ts) != 0

    def kernel(xcol_ref, w_ref, b_ref, y_ref, ssum_ref, ssq_ref):
        s_idx = pl.program_id(1)

        @pl.when(s_idx == 0)
        def _init():
            ssum_ref[...] = jnp.zeros_like(ssum_ref)
            ssq_ref[...] = jnp.zeros_like(ssq_ref)

        x = xcol_ref[0]                                       # (TS, Kc_p) bf16
        y = jnp.dot(x, w_ref[...], preferred_element_type=jnp.float32)
        y = y + b_ref[...]                                    # (TS, C_p) f32
        y_ref[0] = y

        if needs_mask:
            # mask out the zero-padded rows of the last S tile for the stats
            row = (jax.lax.broadcasted_iota(jnp.int32, (y.shape[0], 1), 0)
                   + s_idx * ts)
            ym = jnp.where(row < s_valid, y, 0.0)
        else:
            ym = y
        ssum_ref[0] = ssum_ref[0] + jnp.sum(ym, axis=0, keepdims=True)
        ssq_ref[0] = ssq_ref[0] + jnp.sum(ym * y, axis=0, keepdims=True)

    return kernel


# ----------------------------------------------------------------------------
# Sweep 2: per-channel affine (folded GroupNorm) + residual + ReLU.
# ----------------------------------------------------------------------------
def _apply_kernel(y_ref, ab_ref, res_ref, o_ref):
    y = y_ref[0]                       # (TS, C_p) f32
    ab = ab_ref[0]                     # (2, C_p): row 0 = scale, row 1 = shift
    scale = ab[0:1, :]
    shift = ab[1:2, :]
    z = y * scale + shift + res_ref[0]
    o_ref[0] = jnp.maximum(z, 0.0)


# ----------------------------------------------------------------------------
# Wrapper
# ----------------------------------------------------------------------------
@functools.partial(
    jax.jit,
    static_argnames=("stride", "pad", "dilation", "out_pad", "groups", "eps", "ts"))
def deconv3d_pallas(x_ncdhw, weight, bias, gamma, beta, residual, *,
                    stride=1, pad=1, dilation=1, out_pad=0, groups=1,
                    eps=1e-5, ts=512):
    """Forward of DeConv3D (gn=True, relu=True). weight: (Cin, Cout, K, K, K)."""
    N, Cin, D, H, W = x_ncdhw.shape
    Cout = weight.shape[1]
    K = weight.shape[2]
    assert Cout % groups == 0

    # --- glue: lower ConvTranspose3d to a stride-1 regular conv ------------
    x = jnp.transpose(x_ncdhw, (0, 2, 3, 4, 1))            # NCDHW -> NDHWC
    Dd, Hd, Wd = (D - 1) * stride + 1, (H - 1) * stride + 1, (W - 1) * stride + 1
    xd = jnp.zeros((N, Dd, Hd, Wd, Cin), x.dtype)
    xd = xd.at[:, ::stride, ::stride, ::stride, :].set(x)   # zero-insertion
    lo = dilation * (K - 1) - pad
    hi = lo + out_pad
    assert lo >= 0, "pad > dilation*(K-1) not supported in this demo"
    xp = jnp.pad(xd, ((0, 0), (lo, hi), (lo, hi), (lo, hi), (0, 0)))

    def out_sz(i):
        return (i - 1) * stride - 2 * pad + dilation * (K - 1) + out_pad + 1

    Do, Ho, Wo = out_sz(D), out_sz(H), out_sz(W)
    S = Do * Ho * Wo
    Kc = K * K * K * Cin

    # im2col patches ordered (kd, kh, kw, cin) to match the weight layout.
    patches = []
    for kd in range(K):
        for kh in range(K):
            for kw in range(K):
                patches.append(xp[:, kd * dilation:kd * dilation + Do,
                                     kh * dilation:kh * dilation + Ho,
                                     kw * dilation:kw * dilation + Wo, :])
    xcol = jnp.stack(patches, axis=4).reshape(N, S, Kc)

    # ConvTranspose weight (Cin,Cout,K,K,K) -> flipped regular-conv weight.
    wf = weight[:, :, ::-1, ::-1, ::-1]
    w_mat = jnp.transpose(wf, (2, 3, 4, 0, 1)).reshape(Kc, Cout)

    # --- pad to MXU / lane friendly shapes ----------------------------------
    ts = max(8, _round_up(min(ts, _round_up(S, 8)), 8))
    S_p = _round_up(S, ts)
    Kc_p = _round_up(Kc, 128)
    C_p = _round_up(Cout, 128)
    n_s = S_p // ts

    xcol_p = jnp.zeros((N, S_p, Kc_p), jnp.bfloat16)
    xcol_p = xcol_p.at[:, :S, :Kc].set(xcol.astype(jnp.bfloat16))
    w_p = jnp.zeros((Kc_p, C_p), jnp.bfloat16).at[:Kc, :Cout].set(
        w_mat.astype(jnp.bfloat16))
    b_p = jnp.zeros((1, C_p), jnp.float32).at[0, :Cout].set(bias)

    res = jnp.transpose(residual, (0, 2, 3, 4, 1)).reshape(N, S, Cout)
    res_p = jnp.zeros((N, S_p, C_p), jnp.float32).at[:, :S, :Cout].set(res)

    vmem_limit = 48 * 1024 * 1024     # explicit; safe on v7x's 64 MiB VMEM
    cparams_acc = pltpu.CompilerParams(
        dimension_semantics=("parallel", "arbitrary"),
        vmem_limit_bytes=vmem_limit)
    cparams_par = pltpu.CompilerParams(
        dimension_semantics=("parallel", "parallel"),
        vmem_limit_bytes=vmem_limit)

    # --- sweep 1: matmul + bias + per-channel stats -------------------------
    k1 = _make_matmul_stats_kernel(ts, S)
    y_p, ssum, ssq = pl.pallas_call(
        k1,
        grid=(N, n_s),
        in_specs=[
            pl.BlockSpec((1, ts, Kc_p), lambda n, s: (n, s, 0)),
            pl.BlockSpec((Kc_p, C_p), lambda n, s: (0, 0)),
            pl.BlockSpec((1, C_p), lambda n, s: (0, 0)),
        ],
        out_specs=[
            pl.BlockSpec((1, ts, C_p), lambda n, s: (n, s, 0)),
            pl.BlockSpec((1, 1, C_p), lambda n, s: (n, 0, 0)),   # resident acc
            pl.BlockSpec((1, 1, C_p), lambda n, s: (n, 0, 0)),   # resident acc
        ],
        out_shape=(
            jax.ShapeDtypeStruct((N, S_p, C_p), jnp.float32),
            jax.ShapeDtypeStruct((N, 1, C_p), jnp.float32),
            jax.ShapeDtypeStruct((N, 1, C_p), jnp.float32),
        ),
        compiler_params=cparams_acc,
    )(xcol_p, w_p, b_p)

    # --- tiny glue: pool per-channel stats -> per-group mean/rstd -----------
    cpg = Cout // groups
    cnt = jnp.float32(S * cpg)
    ch_sum = ssum[:, 0, :Cout]                       # (N, Cout)
    ch_sq = ssq[:, 0, :Cout]
    g_sum = ch_sum.reshape(N, groups, cpg).sum(-1)   # (N, G)
    g_sq = ch_sq.reshape(N, groups, cpg).sum(-1)
    mu = g_sum / cnt
    var = jnp.maximum(g_sq / cnt - mu * mu, 0.0)
    rstd = jax.lax.rsqrt(var + eps)
    mu_c = jnp.repeat(mu, cpg, axis=1)               # (N, Cout)
    rstd_c = jnp.repeat(rstd, cpg, axis=1)
    scale_c = rstd_c * gamma[None, :]
    shift_c = beta[None, :] - mu_c * scale_c
    ab = jnp.zeros((N, 2, C_p), jnp.float32)
    ab = ab.at[:, 0, :Cout].set(scale_c)
    ab = ab.at[:, 1, :Cout].set(shift_c)

    # --- sweep 2: normalize + residual + ReLU (residual aliased to output) --
    out_p = pl.pallas_call(
        _apply_kernel,
        grid=(N, n_s),
        in_specs=[
            pl.BlockSpec((1, ts, C_p), lambda n, s: (n, s, 0)),
            pl.BlockSpec((1, 2, C_p), lambda n, s: (n, 0, 0)),
            pl.BlockSpec((1, ts, C_p), lambda n, s: (n, s, 0)),
        ],
        out_specs=pl.BlockSpec((1, ts, C_p), lambda n, s: (n, s, 0)),
        out_shape=jax.ShapeDtypeStruct((N, S_p, C_p), jnp.float32),
        input_output_aliases={2: 0},
        compiler_params=cparams_par,
    )(y_p, ab, res_p)

    out = out_p[:, :S, :Cout].reshape(N, Do, Ho, Wo, Cout)
    return jnp.transpose(out, (0, 4, 1, 2, 3))       # -> NCDHW


# ----------------------------------------------------------------------------
# Pure-JAX reference mirroring the PyTorch module (f32).
# ----------------------------------------------------------------------------
def deconv3d_reference(x, weight, bias, gamma, beta, residual, *,
                       stride, pad, dilation, out_pad, groups, eps=1e-5):
    K = weight.shape[2]
    w_flip = weight[:, :, ::-1, ::-1, ::-1]
    w_oidhw = jnp.transpose(w_flip, (1, 0, 2, 3, 4))
    lo = dilation * (K - 1) - pad
    hi = lo + out_pad
    y = jax.lax.conv_general_dilated(
        x, w_oidhw, window_strides=(1, 1, 1), padding=[(lo, hi)] * 3,
        lhs_dilation=(stride,) * 3, rhs_dilation=(dilation,) * 3,
        dimension_numbers=("NCDHW", "OIDHW", "NCDHW"))
    y = y + bias.reshape(1, -1, 1, 1, 1)
    N, C = y.shape[0], y.shape[1]
    yg = y.reshape(N, groups, C // groups, -1)
    mu = yg.mean(axis=(2, 3), keepdims=True)
    var = ((yg - mu) ** 2).mean(axis=(2, 3), keepdims=True)
    yn = ((yg - mu) / jnp.sqrt(var + eps)).reshape(y.shape)
    yn = yn * gamma.reshape(1, -1, 1, 1, 1) + beta.reshape(1, -1, 1, 1, 1)
    yn = yn + residual
    return jnp.maximum(yn, 0.0)


if __name__ == "__main__":
    # DeConv3D(ch_in=4, ch_out=8, kernel_size=3, stride=2, pad=1, out_pad=1)
    N, Cin, Cout, K = 2, 4, 8, 3
    D = H = W = 4
    stride, pad, dilation, out_pad = 2, 1, 1, 1
    groups = Cout // 4          # GroupNorm(ch_out // 4, ch_out)

    key = jax.random.PRNGKey(0)
    kx, kw, kb, kg, kbt, kr = jax.random.split(key, 6)
    x = jax.random.normal(kx, (N, Cin, D, H, W), jnp.float32)
    weight = 0.1 * jax.random.normal(kw, (Cin, Cout, K, K, K), jnp.float32)
    bias = 0.1 * jax.random.normal(kb, (Cout,), jnp.float32)
    gamma = 1.0 + 0.1 * jax.random.normal(kg, (Cout,), jnp.float32)
    beta = 0.1 * jax.random.normal(kbt, (Cout,), jnp.float32)

    Do = (D - 1) * stride - 2 * pad + dilation * (K - 1) + out_pad + 1
    residual = jax.random.normal(kr, (N, Cout, Do, Do, Do), jnp.float32)

    # The kernel feeds the MXU bf16 operands (f32 accumulation); quantize the
    # conv operands identically so the numeric check stays tight.
    xq = x.astype(jnp.bfloat16).astype(jnp.float32)
    wq = weight.astype(jnp.bfloat16).astype(jnp.float32)

    # ts=192 (multiple of 8, not dividing S=512) also exercises the ragged
    # last-tile masking path of the stats sweep.
    out = deconv3d_pallas(xq, wq, bias, gamma, beta, residual,
                          stride=stride, pad=pad, dilation=dilation,
                          out_pad=out_pad, groups=groups, ts=192)
    out = jax.block_until_ready(out)

    ref = deconv3d_reference(xq, wq, bias, gamma, beta, residual,
                             stride=stride, pad=pad, dilation=dilation,
                             out_pad=out_pad, groups=groups)
    np.testing.assert_allclose(np.asarray(out), np.asarray(ref),
                               rtol=1e-3, atol=1e-3)
    print("KERNEL_OK")
</pallas_src>

<mosaic_0001>
module attributes {stable_mosaic.version = 11 : i64} {
  func.func @kernel(%arg0: i32, %arg1: i32, %arg2: memref<1x192x128xbf16, #tpu.memory_space<vmem>>, %arg3: memref<128x128xbf16, #tpu.memory_space<vmem>>, %arg4: memref<1x128xf32, #tpu.memory_space<vmem>>, %arg5: memref<1x192x128xf32, #tpu.memory_space<vmem>>, %arg6: memref<1x1x128xf32, #tpu.memory_space<vmem>>, %arg7: memref<1x1x128xf32, #tpu.memory_space<vmem>>) attributes {dimension_semantics = [#tpu.dimension_semantics<parallel>, #tpu.dimension_semantics<arbitrary>], iteration_bounds = array<i64: 2, 3>, scalar_prefetch = 0 : i64, scratch_operands = 0 : i64, tpu.core_type = #tpu.core_type<tc>, window_params = [{transform_indices = @transform_0, window_bounds = array<i64: 1, 192, 128>}, {pipeline_mode = #tpu.pipeline_mode<synchronous>, transform_indices = @transform_1, window_bounds = array<i64: 128, 128>}, {pipeline_mode = #tpu.pipeline_mode<synchronous>, transform_indices = @transform_2, window_bounds = array<i64: 1, 128>}, {transform_indices = @transform_3, window_bounds = array<i64: 1, 192, 128>}, {transform_indices = @transform_4, window_bounds = array<i64: 1, 1, 128>}, {transform_indices = @transform_5, window_bounds = array<i64: 1, 1, 128>}]} {
    %c0_i32 = arith.constant 0 : i32
    %0 = arith.cmpi eq, %arg1, %c0_i32 : i32
    %1 = arith.extui %0 : i1 to i32
    %c0_i32_0 = arith.constant 0 : i32
    %2 = arith.cmpi ne, %1, %c0_i32_0 : i32
    scf.if %2 {
      %cst_25 = arith.constant 0.000000e+00 : f32
      %40 = vector.broadcast %cst_25 : f32 to vector<1x1x128xf32>
      %c0_26 = arith.constant 0 : index
      %c0_27 = arith.constant 0 : index
      %c0_28 = arith.constant 0 : index
      %41 = vector.load %arg6[%c0_26, %c0_27, %c0_28] : memref<1x1x128xf32, #tpu.memory_space<vmem>>, vector<1x1x128xf32>
      tpu.vector_store %arg6[%c0_26, %c0_27, %c0_28], %40 {strides = array<i32>} : memref<1x1x128xf32, #tpu.memory_space<vmem>>, vector<1x1x128xf32>,
      %cst_29 = arith.constant 0.000000e+00 : f32
      %42 = vector.broadcast %cst_29 : f32 to vector<1x1x128xf32>
      %c0_30 = arith.constant 0 : index
      %c0_31 = arith.constant 0 : index
      %c0_32 = arith.constant 0 : index
      %43 = vector.load %arg7[%c0_30, %c0_31, %c0_32] : memref<1x1x128xf32, #tpu.memory_space<vmem>>, vector<1x1x128xf32>
      tpu.vector_store %arg7[%c0_30, %c0_31, %c0_32], %42 {strides = array<i32>} : memref<1x1x128xf32, #tpu.memory_space<vmem>>, vector<1x1x128xf32>,
    } else {
    }
    %c0 = arith.constant 0 : index
    %c0_1 = arith.constant 0 : index
    %c0_2 = arith.constant 0 : index
    %3 = vector.load %arg2[%c0, %c0_1, %c0_2] : memref<1x192x128xbf16, #tpu.memory_space<vmem>>, vector<1x192x128xbf16>
    %4 = vector.shape_cast %3 : vector<1x192x128xbf16> to vector<192x128xbf16>
    %c0_3 = arith.constant 0 : index
    %c0_4 = arith.constant 0 : index
    %5 = vector.load %arg3[%c0_3, %c0_4] : memref<128x128xbf16, #tpu.memory_space<vmem>>, vector<128x128xbf16>
    %cst = arith.constant dense<0.000000e+00> : vector<192x128xf32>
    %6 = tpu.matmul %4, %5, %cst {dimension_numbers = #tpu.dot_dimension_numbers<[1], [0], [0], [1], [0, 0, 1, 1], [], []>} : vector<192x128xbf16>, vector<128x128xbf16>, vector<192x128xf32> -> vector<192x128xf32>
    %c0_5 = arith.constant 0 : index
    %c0_6 = arith.constant 0 : index
    %7 = vector.load %arg4[%c0_5, %c0_6] : memref<1x128xf32, #tpu.memory_space<vmem>>, vector<1x128xf32>
    %8 = vector.broadcast %7 : vector<1x128xf32> to vector<192x128xf32>
    %9 = arith.addf %6, %8 : vector<192x128xf32>
    %c0_7 = arith.constant 0 : index
    %c0_8 = arith.constant 0 : index
    %c0_9 = arith.constant 0 : index
    %10 = vector.load %arg5[%c0_7, %c0_8, %c0_9] : memref<1x192x128xf32, #tpu.memory_space<vmem>>, vector<1x192x128xf32>
    %11 = vector.shape_cast %10 : vector<1x192x128xf32> to vector<192x128xf32>
    %12 = vector.shape_cast %9 : vector<192x128xf32> to vector<1x192x128xf32>
    tpu.vector_store %arg5[%c0_7, %c0_8, %c0_9], %12 {strides = array<i32>} : memref<1x192x128xf32, #tpu.memory_space<vmem>>, vector<1x192x128xf32>,
    %13 = tpu.iota {dimensions = array<i32: 0>} : vector<192x1xi32>
    %c192_i32 = arith.constant 192 : i32
    %14 = arith.muli %arg1, %c192_i32 : i32
    %15 = vector.broadcast %14 : i32 to vector<192x1xi32>
    %16 = arith.addi %13, %15 : vector<192x1xi32>
    %c512_i32 = arith.constant 512 : i32
    %17 = vector.broadcast %c512_i32 : i32 to vector<192x1xi32>
    %18 = arith.cmpi slt, %16, %17 : vector<192x1xi32>
    %cst_10 = arith.constant 0.000000e+00 : f32
    %19 = vector.shape_cast %18 : vector<192x1xi1> to vector<192x1xi1>
    %20 = vector.broadcast %19 : vector<192x1xi1> to vector<192x128xi1>
    %21 = vector.broadcast %cst_10 : f32 to vector<192x128xf32>
    %22 = arith.select %20, %9, %21 : vector<192x128xi1>, vector<192x128xf32>
    %c0_11 = arith.constant 0 : index
    %c0_12 = arith.constant 0 : index
    %c0_13 = arith.constant 0 : index
    %23 = vector.load %arg6[%c0_11, %c0_12, %c0_13] : memref<1x1x128xf32, #tpu.memory_space<vmem>>, vector<1x1x128xf32>
    %24 = vector.shape_cast %23 : vector<1x1x128xf32> to vector<1x128xf32>
    %cst_14 = arith.constant dense<0.000000e+00> : vector<128xf32>
    %25 = vector.multi_reduction <add>, %22, %cst_14 [0] : vector<192x128xf32> to vector<128xf32>
    %26 = vector.shape_cast %25 : vector<128xf32> to vector<1x128xf32>
    %27 = arith.addf %24, %26 : vector<1x128xf32>
    %c0_15 = arith.constant 0 : index
    %c0_16 = arith.constant 0 : index
    %c0_17 = arith.constant 0 : index
    %28 = vector.load %arg6[%c0_15, %c0_16, %c0_17] : memref<1x1x128xf32, #tpu.memory_space<vmem>>, vector<1x1x128xf32>
    %29 = vector.shape_cast %28 : vector<1x1x128xf32> to vector<1x128xf32>
    %30 = vector.shape_cast %27 : vector<1x128xf32> to vector<1x1x128xf32>
    tpu.vector_store %arg6[%c0_15, %c0_16, %c0_17], %30 {strides = array<i32>} : memref<1x1x128xf32, #tpu.memory_space<vmem>>, vector<1x1x128xf32>,
    %c0_18 = arith.constant 0 : index
    %c0_19 = arith.constant 0 : index
    %c0_20 = arith.constant 0 : index
    %31 = vector.load %arg7[%c0_18, %c0_19, %c0_20] : memref<1x1x128xf32, #tpu.memory_space<vmem>>, vector<1x1x128xf32>
    %32 = vector.shape_cast %31 : vector<1x1x128xf32> to vector<1x128xf32>
    %33 = arith.mulf %22, %9 : vector<192x128xf32>
    %cst_21 = arith.constant dense<0.000000e+00> : vector<128xf32>
    %34 = vector.multi_reduction <add>, %33, %cst_21 [0] : vector<192x128xf32> to vector<128xf32>
    %35 = vector.shape_cast %34 : vector<128xf32> to vector<1x128xf32>
    %36 = arith.addf %32, %35 : vector<1x128xf32>
    %c0_22 = arith.constant 0 : index
    %c0_23 = arith.constant 0 : index
    %c0_24 = arith.constant 0 : index
    %37 = vector.load %arg7[%c0_22, %c0_23, %c0_24] : memref<1x1x128xf32, #tpu.memory_space<vmem>>, vector<1x1x128xf32>
    %38 = vector.shape_cast %37 : vector<1x1x128xf32> to vector<1x128xf32>
    %39 = vector.shape_cast %36 : vector<1x128xf32> to vector<1x1x128xf32>
    tpu.vector_store %arg7[%c0_22, %c0_23, %c0_24], %39 {strides = array<i32>} : memref<1x1x128xf32, #tpu.memory_space<vmem>>, vector<1x1x128xf32>,
    return
  }
  func.func @transform_0(%arg0: i32, %arg1: i32) -> (i32, i32, i32) {
    %c0_i32 = arith.constant 0 : i32
    %c0_i32_0 = arith.constant 0 : i32
    return %arg0, %arg1, %c0_i32 : i32, i32, i32
  }
  func.func @transform_1(%arg0: i32, %arg1: i32) -> (i32, i32) {
    %c0_i32 = arith.constant 0 : i32
    %c0_i32_0 = arith.constant 0 : i32
    %c0_i32_1 = arith.constant 0 : i32
    return %c0_i32, %c0_i32_0 : i32, i32
  }
  func.func @transform_2(%arg0: i32, %arg1: i32) -> (i32, i32) {
    %c0_i32 = arith.constant 0 : i32
    %c0_i32_0 = arith.constant 0 : i32
    %c0_i32_1 = arith.constant 0 : i32
    return %c0_i32, %c0_i32_0 : i32, i32
  }
  func.func @transform_3(%arg0: i32, %arg1: i32) -> (i32, i32, i32) {
    %c0_i32 = arith.constant 0 : i32
    %c0_i32_0 = arith.constant 0 : i32
    return %arg0, %arg1, %c0_i32 : i32, i32, i32
  }
  func.func @transform_4(%arg0: i32, %arg1: i32) -> (i32, i32, i32) {
    %c0_i32 = arith.constant 0 : i32
    %c0_i32_0 = arith.constant 0 : i32
    %c0_i32_1 = arith.constant 0 : i32
    return %arg0, %c0_i32, %c0_i32_0 : i32, i32, i32
  }
  func.func @transform_5(%arg0: i32, %arg1: i32) -> (i32, i32, i32) {
    %c0_i32 = arith.constant 0 : i32
    %c0_i32_0 = arith.constant 0 : i32
    %c0_i32_1 = arith.constant 0 : i32
    return %arg0, %c0_i32, %c0_i32_0 : i32, i32, i32
  }
}

module attributes {stable_mosaic.version = 11 : i64} {
  func.func @_apply_kernel(%arg0: i32, %arg1: i32, %arg2: memref<1x192x128xf32, #tpu.memory_space<vmem>>, %arg3: memref<1x2x128xf32, #tpu.memory_space<vmem>>, %arg4: memref<1x192x128xf32, #tpu.memory_space<vmem>>, %arg5: memref<1x192x128xf32, #tpu.memory_space<vmem>>) attributes {dimension_semantics = [#tpu.dimension_semantics<parallel>, #tpu.dimension_semantics<parallel>], iteration_bounds = array<i64: 2, 3>, scalar_prefetch = 0 : i64, scratch_operands = 0 : i64, tpu.core_type = #tpu.core_type<tc>, window_params = [{transform_indices = @transform_0, window_bounds = array<i64: 1, 192, 128>}, {transform_indices = @transform_1, window_bounds = array<i64: 1, 2, 128>}, {transform_indices = @transform_2, window_bounds = array<i64: 1, 192, 128>}, {transform_indices = @transform_3, window_bounds = array<i64: 1, 192, 128>}]} {
    %c0 = arith.constant 0 : index
    %c0_0 = arith.constant 0 : index
    %c0_1 = arith.constant 0 : index
    %0 = vector.load %arg2[%c0, %c0_0, %c0_1] : memref<1x192x128xf32, #tpu.memory_space<vmem>>, vector<1x192x128xf32>
    %1 = vector.shape_cast %0 : vector<1x192x128xf32> to vector<192x128xf32>
    %c0_2 = arith.constant 0 : index
    %c0_3 = arith.constant 0 : index
    %c0_4 = arith.constant 0 : index
    %2 = vector.load %arg3[%c0_2, %c0_3, %c0_4] : memref<1x2x128xf32, #tpu.memory_space<vmem>>, vector<1x2x128xf32>
    %3 = vector.shape_cast %2 : vector<1x2x128xf32> to vector<2x128xf32>
    %4 = vector.extract_strided_slice %3 {offsets = [0, 0], sizes = [1, 128], strides = [1, 1]} : vector<2x128xf32> to vector<1x128xf32>
    %5 = vector.extract_strided_slice %3 {offsets = [1, 0], sizes = [1, 128], strides = [1, 1]} : vector<2x128xf32> to vector<1x128xf32>
    %6 = vector.broadcast %4 : vector<1x128xf32> to vector<192x128xf32>
    %7 = arith.mulf %1, %6 : vector<192x128xf32>
    %8 = vector.broadcast %5 : vector<1x128xf32> to vector<192x128xf32>
    %9 = arith.addf %7, %8 : vector<192x128xf32>
    %c0_5 = arith.constant 0 : index
    %c0_6 = arith.constant 0 : index
    %c0_7 = arith.constant 0 : index
    %10 = vector.load %arg4[%c0_5, %c0_6, %c0_7] : memref<1x192x128xf32, #tpu.memory_space<vmem>>, vector<1x192x128xf32>
    %11 = vector.shape_cast %10 : vector<1x192x128xf32> to vector<192x128xf32>
    %12 = arith.addf %9, %11 : vector<192x128xf32>
    %cst = arith.constant 0.000000e+00 : f32
    %13 = vector.broadcast %cst : f32 to vector<192x128xf32>
    %14 = arith.maximumf %12, %13 : vector<192x128xf32>
    %c0_8 = arith.constant 0 : index
    %c0_9 = arith.constant 0 : index
    %c0_10 = arith.constant 0 : index
    %15 = vector.load %arg5[%c0_8, %c0_9, %c0_10] : memref<1x192x128xf32, #tpu.memory_space<vmem>>, vector<1x192x128xf32>
    %16 = vector.shape_cast %15 : vector<1x192x128xf32> to vector<192x128xf32>
    %17 = vector.shape_cast %14 : vector<192x128xf32> to vector<1x192x128xf32>
    tpu.vector_store %arg5[%c0_8, %c0_9, %c0_10], %17 {strides = array<i32>} : memref<1x192x128xf32, #tpu.memory_space<vmem>>, vector<1x192x128xf32>,
    return
  }
  func.func @transform_0(%arg0: i32, %arg1: i32) -> (i32, i32, i32) {
    %c0_i32 = arith.constant 0 : i32
    %c0_i32_0 = arith.constant 0 : i32
    return %arg0, %arg1, %c0_i32 : i32, i32, i32
  }
  func.func @transform_1(%arg0: i32, %arg1: i32) -> (i32, i32, i32) {
    %c0_i32 = arith.constant 0 : i32
    %c0_i32_0 = arith.constant 0 : i32
    %c0_i32_1 = arith.constant 0 : i32
    return %arg0, %c0_i32, %c0_i32_0 : i32, i32, i32
  }
  func.func @transform_2(%arg0: i32, %arg1: i32) -> (i32, i32, i32) {
    %c0_i32 = arith.constant 0 : i32
    %c0_i32_0 = arith.constant 0 : i32
    return %arg0, %arg1, %c0_i32 : i32, i32, i32
  }
  func.func @transform_3(%arg0: i32, %arg1: i32) -> (i32, i32, i32) {
    %c0_i32 = arith.constant 0 : i32
    %c0_i32_0 = arith.constant 0 : i32
    return %arg0, %arg1, %c0_i32 : i32, i32, i32
  }
}

</mosaic_0001>

<llo_original>
// kernel: squeeze.2
$region0: #{squeeze.2}
  %s0 = inlined_call_operand.vmem [shape: f32[2,8], index: 0, kind: input, shape index: {}]
  %s1 = inlined_call_operand.vmem [shape: f32[2,2,4], index: 1, kind: output, shape index: {}]
  $region1: #{squeeze.2} parent=0
    #allocation0 [shape = 'u8[8192]{0}', space=vmem, size = 0x2000, scoped, tag = 'scoped mem for output reshape']
    #allocation1 [shape = 'u8[4096]{0}', space=vmem, size = 0x1000, scoped, tag = 'scoped mem for input reshape']
    %s3 = sshllo.u32 0, 2
    %v4 = vld [vmem:[%s0] sm:%s3]
    %5 = vst [vmem:[#allocation1] sm:%s3] %v4
    %v6 = vld [vmem:[#allocation1] sm:$0x3]
    %vm7 = vcmask 31744
    %8 = vst.msk [vmem:[#allocation0] ss:$8 sm:$0x3] %vm7, %v6
    %v9 = vld [vmem:[#allocation1] sm:$0x3]
    %10 = vrot.lane.b32.xlu0 %v9, 124
    %v11 = vpop.permute.xlu0 %10
    %vm12 = vcmask 31744
    %s13 = scalar_lea.vmem [#allocation0], 1
    %14 = vst.msk [vmem:[%s13] ss:$8 sm:$0x3] %vm12, %v11
    %s16 = sshllo.u32 0, 2
    %v18 = vld [vmem:[#allocation0] sm:%s16]
    %s19 = sshllo.u32 0, 2
    %20 = vst [vmem:[%s1] sm:%s19] %v18
    %s21 = scalar_lea.vmem [#allocation0], 8
    %v22 = vld [vmem:[%s21] sm:%s16]
    %s23 = sshllo.u32 0, 2
    %s24 = scalar_lea.vmem %s1, 2
    %25 = vst [vmem:[%s24] sm:%s23] %v22

// kernel: deconv3d_pallas.2
$region0: #{deconv3d_pallas.2}
  #allocation0 [shape = 'u32[]', space=smem, size = 0x4, offset = 0x4, fixed_abs, tag = 'smem constant byte address 0x4 - core index']
  #allocation1 [shape = 'u32[144,128]{1,0:T(1,128)}', space=vmem, size = 0x12000, scoped, tag = 'internal scratch']
  %s0 = inlined_call_operand.vmem [shape: bf16[2,576,128], index: 0, kind: input, shape index: {}]
  %s1 = inlined_call_operand.vmem [shape: bf16[128,128], index: 1, kind: input, shape index: {}]
  %s2 = inlined_call_operand.vmem [shape: f32[1,128], index: 2, kind: input, shape index: {}]
  %s3 = inlined_call_operand.vmem [shape: f32[2,576,128], index: 3, kind: output, shape index: {0}]
  %s4 = inlined_call_operand.vmem [shape: f32[2,1,128], index: 4, kind: output, shape index: {1}]
  %s5 = inlined_call_operand.vmem [shape: f32[2,1,128], index: 5, kind: output, shape index: {2}]
  %6 = xla_tuple %s3, %s4, %s5
  %s7 = sld [smem:[#allocation0]]
  $region65: #{deconv3d_pallas.2} parent=0
    _
  %s9 = ssub.s32 1, %s7
  %s10 = scalar_select 0, %s9, %s7
  loop: start=0, step=1, limit=8
  $region2: #{deconv3d_pallas.2} parent=0 // loop_pre_header
    _
  $region3: #{deconv3d_pallas.2} parent=0 // loop_header
    %s12 = sphi 0, %s16
    %p13 = scmp.ge.s32.totalorder %s12, 8
    %s19 = sphi 0, %s31
    %s20 = sphi 0, %s27
    %s21 = sphi 0, %s19
    %s22 = sphi 0, %s20
    %s23 = sphi 0, %s21
    %s24 = sphi 0, %s22
    %s36 = sphi 0, %s38
    %s39 = sphi 0, %s36
    %s40 = sphi 0, %s39
    %s56 = sphi 0, %s40
    %s60 = sphi 0, %s60
    %s62 = sphi 0, %s60
    %s63 = sphi 0, %s62
    %s77 = sphi 0, %s63
    %s81 = sphi 0, %s81
    %s83 = sphi 0, %s81
    %s84 = sphi 0, %s83
    %s98 = sphi 0, %s84
    %s106 = sphi 0, %s108
    %s109 = sphi 0, %s106
    %s110 = sphi 0, %s109
    %s126 = sphi 0, %s110
    %s132 = sphi 0, %s134
    %s135 = sphi 0, %s132
    %s136 = sphi 0, %s135
    %s152 = sphi 0, %s136
    %s158 = sphi 0, %s160
    %s161 = sphi 0, %s158
    %s162 = sphi 0, %s161
    %s178 = sphi 0, %s162
  $region4: #{deconv3d_pallas.2} parent=0 // loop_header_branch
    %15 = sbr.rel (%p13) target = $region8
  $region5: #{deconv3d_pallas.2} parent=0 // loop_body
    %s17 = ssub.s32 %s12, 1
    %s18 = ssub.s32 %s12, 2
    %s25 = sadd.s32 1, %s20
    %p26 = scmp.ge.s32.totalorder %s25, 3
    %s27 = scalar_select %p26, 0, %s25
    %s28 = sadd.s32 1, %s19
    %s29 = scalar_select %p26, %s28, %s19
    %p30 = scmp.ge.s32.totalorder %s29, 2
    %s31 = scalar_select %p30, 0, %s29
    %s32 = ssub.s32 %s19, %s31
    %s33 = ssub.s32 %s20, %s27
    %s34 = sor.u32 %s32, %s33
    %p35 = scmp.eq.s32.totalorder %s34, 0
    %s37 = sadd.s32 %s36, 1
    %s38 = scalar_select %p35, %s36, %s37
    %p41 = pneg %p35
    %p42 = scmp.eq.s32.totalorder %s12, 5
    %p43 = por %p41, %p42
    %p44 = scmp.ne.s32.totalorder %s36, %s39
    %p45 = scmp.eq.s32.totalorder %s12, 0
    %p46 = por %p44, %p45
    %p47 = scmp.ne.s32.totalorder %s36, %s39
    %p48 = scmp.eq.s32.totalorder %s17, 5
    %p49 = por %p47, %p48
    %p50 = scmp.ne.s32.totalorder %s39, %s40
    %p51 = scmp.eq.s32.totalorder %s17, 0
    %p52 = por %p50, %p51
    %p53 = scmp.ne.s32.totalorder %s39, %s40
    %p54 = scmp.eq.s32.totalorder %s18, 5
    %p55 = por %p53, %p54
    %p57 = scmp.ne.s32.totalorder %s40, %s56
    %p58 = scmp.eq.s32.totalorder %s18, 0
    %p59 = por %p57, %p58
    %s61 = sadd.s32 %s60, 1
    %p64 = scmp.eq.s32.totalorder %s12, 5
    %p65 = scmp.ne.s32.totalorder %s60, %s62
    %p66 = scmp.eq.s32.totalorder %s12, 0
    %p67 = por %p65, %p66
    %p68 = scmp.ne.s32.totalorder %s60, %s62
    %p69 = scmp.eq.s32.totalorder %s17, 5
    %p70 = por %p68, %p69
    %p71 = scmp.ne.s32.totalorder %s62, %s63
    %p72 = scmp.eq.s32.totalorder %s17, 0
    %p73 = por %p71, %p72
    %p74 = scmp.ne.s32.totalorder %s62, %s63
    %p75 = scmp.eq.s32.totalorder %s18, 5
    %p76 = por %p74, %p75
    %p78 = scmp.ne.s32.totalorder %s63, %s77
    %p79 = scmp.eq.s32.totalorder %s18, 0
    %p80 = por %p78, %p79
    %s82 = sadd.s32 %s81, 1
    %p85 = scmp.eq.s32.totalorder %s12, 5
    %p86 = scmp.ne.s32.totalorder %s81, %s83
    %p87 = scmp.eq.s32.totalorder %s12, 0
    %p88 = por %p86, %p87
    %p89 = scmp.ne.s32.totalorder %s81, %s83
    %p90 = scmp.eq.s32.totalorder %s17, 5
    %p91 = por %p89, %p90
    %p92 = scmp.ne.s32.totalorder %s83, %s84
    %p93 = scmp.eq.s32.totalorder %s17, 0
    %p94 = por %p92, %p93
    %p95 = scmp.ne.s32.totalorder %s83, %s84
    %p96 = scmp.eq.s32.totalorder %s18, 5
    %p97 = por %p95, %p96
    %p99 = scmp.ne.s32.totalorder %s84, %s98
    %p100 = scmp.eq.s32.totalorder %s18, 0
    %p101 = por %p99, %p100
    %s102 = ssub.s32 %s19, %s31
    %s103 = ssub.s32 %s20, %s27
    %s104 = sor.u32 %s102, %s103
    %p105 = scmp.eq.s32.totalorder %s104, 0
    %s107 = sadd.s32 %s106, 1
    %s108 = scalar_select %p105, %s106, %s107
    %p111 = pneg %p105
    %p112 = scmp.eq.s32.totalorder %s12, 5
    %p113 = por %p111, %p112
    %p114 = scmp.ne.s32.totalorder %s106, %s109
    %p115 = scmp.eq.s32.totalorder %s12, 0
    %p116 = por %p114, %p115
    %p117 = scmp.ne.s32.totalorder %s106, %s109
    %p118 = scmp.eq.s32.totalorder %s17, 5
    %p119 = por %p117, %p118
    %p120 = scmp.ne.s32.totalorder %s109, %s110
    %p121 = scmp.eq.s32.totalorder %s17, 0
    %p122 = por %p120, %p121
    %p123 = scmp.ne.s32.totalorder %s109, %s110
    %p124 = scmp.eq.s32.totalorder %s18, 5
    %p125 = por %p123, %p124
    %p127 = scmp.ne.s32.totalorder %s110, %s126
    %p128 = scmp.eq.s32.totalorder %s18, 0
    %p129 = por %p127, %p128
    %s130 = ssub.s32 %s19, %s31
    %p131 = scmp.eq.s32.totalorder %s130, 0
    %s133 = sadd.s32 %s132, 1
    %s134 = scalar_select %p131, %s132, %s133
    %p137 = pneg %p131
    %p138 = scmp.eq.s32.totalorder %s12, 5
    %p139 = por %p137, %p138
    %p140 = scmp.ne.s32.totalorder %s132, %s135
    %p141 = scmp.eq.s32.totalorder %s12, 0
    %p142 = por %p140, %p141
    %p143 = scmp.ne.s32.totalorder %s132, %s135
    %p144 = scmp.eq.s32.totalorder %s17, 5
    %p145 = por %p143, %p144
    %p146 = scmp.ne.s32.totalorder %s135, %s136
    %p147 = scmp.eq.s32.totalorder %s17, 0
    %p148 = por %p146, %p147
    %p149 = scmp.ne.s32.totalorder %s135, %s136
    %p150 = scmp.eq.s32.totalorder %s18, 5
    %p151 = por %p149, %p150
    %p153 = scmp.ne.s32.totalorder %s136, %s152
    %p154 = scmp.eq.s32.totalorder %s18, 0
    %p155 = por %p153, %p154
    %s156 = ssub.s32 %s19, %s31
    %p157 = scmp.eq.s32.totalorder %s156, 0
    %s159 = sadd.s32 %s158, 1
    %s160 = scalar_select %p157, %s158, %s159
    %p163 = pneg %p157
    %p164 = scmp.eq.s32.totalorder %s12, 5
    %p165 = por %p163, %p164
    %p166 = scmp.ne.s32.totalorder %s158, %s161
    %p167 = scmp.eq.s32.totalorder %s12, 0
    %p168 = por %p166, %p167
    %p169 = scmp.ne.s32.totalorder %s158, %s161
    %p170 = scmp.eq.s32.totalorder %s17, 5
    %p171 = por %p169, %p170
    %p172 = scmp.ne.s32.totalorder %s161, %s162
    %p173 = scmp.eq.s32.totalorder %s17, 0
    %p174 = por %p172, %p173
    %p175 = scmp.ne.s32.totalorder %s161, %s162
    %p176 = scmp.eq.s32.totalorder %s18, 5
    %p177 = por %p175, %p176
    %p179 = scmp.ne.s32.totalorder %s162, %s178
    %p180 = scmp.eq.s32.totalorder %s18, 0
    %p181 = por %p179, %p180
    %p182 = scmp.le.s32.totalorder 1, %s12
    %p183 = scmp.lt.s32.totalorder %s12, 7
    %p184 = pnand %p182, %p183
    %p185 = pneg %p184
    // Predicated region
    $region9: #{deconv3d_pallas.2} parent=5 // pred_check
      _
    $region10: #{deconv3d_pallas.2} parent=5 // pred_check_branch
      %187 = sbr.rel (%p184) target = $region12
    $region11: #{deconv3d_pallas.2} parent=5 // pred_region
      %s188 = ssub.s32 %s12, 1
      // Predicated region
      $region13: #{deconv3d_pallas.2} parent=11 // pred_check
        %p189 = pneg %p73
      $region14: #{deconv3d_pallas.2} parent=11 // pred_check_branch
        %191 = sbr.rel (%p189) target = $region16
      $region15: #{deconv3d_pallas.2} parent=11 // pred_region
        _
      $region16: #{deconv3d_pallas.2} parent=11 // pred_fallthru
        _
      // Predicated region
      $region17: #{deconv3d_pallas.2} parent=11 // pred_check
        %p192 = pneg %p94
      $region18: #{deconv3d_pallas.2} parent=11 // pred_check_branch
        %194 = sbr.rel (%p192) target = $region20
      $region19: #{deconv3d_pallas.2} parent=11 // pred_region
        _
      $region20: #{deconv3d_pallas.2} parent=11 // pred_fallthru
        _
    $region12: #{deconv3d_pallas.2} parent=5 // pred_fallthru
      _
    %p195 = scmp.lt.s32.totalorder %s12, 6
    // Predicated region
    $region21: #{deconv3d_pallas.2} parent=5 // pred_check
      %p196 = pneg %p195
    $region22: #{deconv3d_pallas.2} parent=5 // pred_check_branch
      %198 = sbr.rel (%p196) target = $region24
    $region23: #{deconv3d_pallas.2} parent=5 // pred_region
      // Predicated region
      $region25: #{deconv3d_pallas.2} parent=23 // pred_check
        %p199 = pneg %p46
      $region26: #{deconv3d_pallas.2} parent=23 // pred_check_branch
        %201 = sbr.rel (%p199) target = $region28
      $region27: #{deconv3d_pallas.2} parent=23 // pred_region
        %s202 = smul.u32 24, %s20
        %p203 = scmp.lt.s32.totalorder %s19, 1
        %s204 = scalar_select %p203, %s19, 1
        %p205 = scmp.lt.s32.totalorder %s202, 71
        %s206 = scalar_select %p205, %s202, 71
        %s207 = smul.addr %s204, 72
        %s208 = sadd.s32 %s206, %s207
        %s209 = smul.addr %s208, 4
        %s210 = scalar_lea.vmem %s0, %s209
        %s211 = smul.u32 24, %s20
      $region28: #{deconv3d_pallas.2} parent=23 // pred_fallthru
        _
    $region24: #{deconv3d_pallas.2} parent=5 // pred_fallthru
      _
    %p212 = scmp.le.s32.totalorder 1, %s12
    %p213 = scmp.lt.s32.totalorder %s12, 7
    %p214 = pnand %p212, %p213
    %p215 = pneg %p214
    // Predicated region
    $region29: #{deconv3d_pallas.2} parent=5 // pred_check
      _
    $region30: #{deconv3d_pallas.2} parent=5 // pred_check_branch
      %217 = sbr.rel (%p214) target = $region32
    $region31: #{deconv3d_pallas.2} parent=5 // pred_region
      %s218 = ssub.s32 %s12, 1
      %s219 = smul.u32 24, %s22
      %p220 = scmp.lt.s32.totalorder %s21, 1
      %s221 = scalar_select %p220, %s21, 1
      %p222 = scmp.lt.s32.totalorder %s219, 71
      %s223 = scalar_select %p222, %s219, 71
      %s224 = smul.addr %s221, 72
      %s225 = sadd.s32 %s223, %s224
      %s226 = smul.addr %s225, 4
      %s227 = scalar_lea.vmem %s0, %s226
      %p228 = pneg %p52
      %p229 = pneg %p49
      %p230 = pneg %p73
      %p231 = pneg %p70
      %p232 = pneg %p94
      %p233 = pneg %p91
      %p234 = pneg %p122
      %p235 = pneg %p119
      %s236 = smul.u32 24, %s22
      %p237 = scmp.lt.s32.totalorder %s21, 1
      %s238 = scalar_select %p237, %s21, 1
      %p239 = scmp.lt.s32.totalorder %s236, 71
      %s240 = scalar_select %p239, %s236, 71
      %s241 = smul.addr %s238, 72
      %s242 = sadd.s32 %s240, %s241
      %s243 = smul.addr %s242, 8
      %s244 = scalar_lea.vmem %s3, %s243
      %p245 = pneg %p148
      %p246 = pneg %p145
      %p247 = scmp.lt.s32.totalorder %s21, 1
      %s248 = scalar_select %p247, %s21, 1
      %s249 = scalar_lea.vmem %s4, %s248
      %p250 = pneg %p174
      %p251 = pneg %p171
      %p252 = scmp.lt.s32.totalorder %s21, 1
      %s253 = scalar_select %p252, %s21, 1
      %s254 = scalar_lea.vmem %s5, %s253
      %s255 = smul.u32 24, %s22
      %p256 = scmp.lt.s32.totalorder %s21, 1
      %s257 = scalar_select %p256, %s21, 1
      %p258 = scmp.lt.s32.totalorder %s255, 71
      %s259 = scalar_select %p258, %s255, 71
      %s260 = smul.addr %s257, 72
      %s261 = sadd.s32 %s259, %s260
      %s262 = smul.addr %s261, 4
      %s263 = scalar_lea.vmem %s0, %s262
      %s264 = smul.u32 24, %s22
      %s265 = smul.u32 24, %s22
      %p266 = scmp.lt.s32.totalorder %s21, 1
      %s267 = scalar_select %p266, %s21, 1
      %p268 = scmp.lt.s32.totalorder %s265, 71
      %s269 = scalar_select %p268, %s265, 71
      %s270 = smul.addr %s267, 72
      %s271 = sadd.s32 %s269, %s270
      %s272 = smul.addr %s271, 8
      %s273 = scalar_lea.vmem %s3, %s272
      %s274 = smul.u32 24, %s22
      %p275 = scmp.lt.s32.totalorder %s21, 1
      %s276 = scalar_select %p275, %s21, 1
      %s277 = scalar_lea.vmem %s4, %s276
      %p278 = scmp.lt.s32.totalorder %s21, 1
      %s279 = scalar_select %p278, %s21, 1
      %s280 = scalar_lea.vmem %s5, %s279
      %p282 = scmp.eq.s32.totalorder %s22, 0
      // Predicated region
      $region33: #{deconv3d_pallas.2} parent=31 // pred_check
        %p283 = pneg %p282
      $region34: #{deconv3d_pallas.2} parent=31 // pred_check_branch
        %285 = sbr.rel (%p283) target = $region36
      $region35: #{deconv3d_pallas.2} parent=31 // pred_region
        %286 = vst [vmem:[%s277] sm:$0x1] 0.0
        %287 = vst [vmem:[%s280] sm:$0x1] 0.0
      $region36: #{deconv3d_pallas.2} parent=31 // pred_fallthru
        _
      %v288 = vld [vmem:[%s263] sm:$0xf]
      %v289 = vld [vmem:[%s263 + $0x4] sm:$0xf]
      %v290 = vld [vmem:[%s263 + $0x8] sm:$0xf]
      %v291 = vld [vmem:[%s263 + $0xc] sm:$0xf]
      %v292 = vld [vmem:[%s263 + $0x10] sm:$0xf]
      %v293 = vld [vmem:[%s263 + $0x14] sm:$0xf]
      %v294 = vld [vmem:[%s263 + $0x18] sm:$0xf]
      %v295 = vld [vmem:[%s263 + $0x1c] sm:$0xf]
      %v296 = vld [vmem:[%s263 + $0x20] sm:$0xf]
      %v297 = vld [vmem:[%s263 + $0x24] sm:$0xf]
      %v298 = vld [vmem:[%s263 + $0x28] sm:$0xf]
      %v299 = vld [vmem:[%s263 + $0x2c] sm:$0xf]
      %v300 = vld [vmem:[%s263 + $0x30] sm:$0xf]
      %v301 = vld [vmem:[%s263 + $0x34] sm:$0xf]
      %v302 = vld [vmem:[%s263 + $0x38] sm:$0xf]
      %v303 = vld [vmem:[%s263 + $0x3c] sm:$0xf]
      %v304 = vld [vmem:[%s263 + $0x40] sm:$0xf]
      %v305 = vld [vmem:[%s263 + $0x44] sm:$0xf]
      %v306 = vld [vmem:[%s263 + $0x48] sm:$0xf]
      %v307 = vld [vmem:[%s263 + $0x4c] sm:$0xf]
      %v308 = vld [vmem:[%s263 + $0x50] sm:$0xf]
      %v309 = vld [vmem:[%s263 + $0x54] sm:$0xf]
      %v310 = vld [vmem:[%s263 + $0x58] sm:$0xf]
      %v311 = vld [vmem:[%s263 + $0x5c] sm:$0xf]
      %v312 = vld [vmem:[%s1] sm:$0xf]
      %v313 = vld [vmem:[%s1 + $0x4] sm:$0xf]
      %v314 = vld [vmem:[%s1 + $0x8] sm:$0xf]
      %v315 = vld [vmem:[%s1 + $0xc] sm:$0xf]
      %v316 = vld [vmem:[%s1 + $0x10] sm:$0xf]
      %v317 = vld [vmem:[%s1 + $0x14] sm:$0xf]
      %v318 = vld [vmem:[%s1 + $0x18] sm:$0xf]
      %v319 = vld [vmem:[%s1 + $0x1c] sm:$0xf]
      %v320 = vld [vmem:[%s1 + $0x20] sm:$0xf]
      %v321 = vld [vmem:[%s1 + $0x24] sm:$0xf]
      %v322 = vld [vmem:[%s1 + $0x28] sm:$0xf]
      %v323 = vld [vmem:[%s1 + $0x2c] sm:$0xf]
      %v324 = vld [vmem:[%s1 + $0x30] sm:$0xf]
      %v325 = vld [vmem:[%s1 + $0x34] sm:$0xf]
      %v326 = vld [vmem:[%s1 + $0x38] sm:$0xf]
      %v327 = vld [vmem:[%s1 + $0x3c] sm:$0xf]
      %v328 = vld [vmem:[%s2] sm:$0x1]
      %v330 = vlaneseq
      %v331 = vshrl.u32 %v330, 7
      %v332 = vsub.s32 0, %v331
      %v333 = vrot.slane %v328, %v332
      %v359 = vunpack.c.l.b16 %v288
      %v360 = vunpack.c.l.b16 %v289
      %v361 = vunpack.c.l.b16 %v290
      %v362 = vunpack.c.l.b16 %v291
      %v363 = vunpack.c.l.b16 %v292
      %v364 = vunpack.c.l.b16 %v293
      %v365 = vunpack.c.l.b16 %v294
      %v366 = vunpack.c.l.b16 %v295
      %v367 = vunpack.c.l.b16 %v296
      %v368 = vunpack.c.l.b16 %v297
      %v369 = vunpack.c.l.b16 %v298
      %v370 = vunpack.c.l.b16 %v299
      %v371 = vunpack.c.l.b16 %v300
      %v372 = vunpack.c.l.b16 %v301
      %v373 = vunpack.c.l.b16 %v302
      %v374 = vunpack.c.l.b16 %v303
      %v375 = vunpack.c.l.b16 %v304
      %v376 = vunpack.c.l.b16 %v305
      %v377 = vunpack.c.l.b16 %v306
      %v378 = vunpack.c.l.b16 %v307
      %v379 = vunpack.c.l.b16 %v308
      %v380 = vunpack.c.l.b16 %v309
      %v381 = vunpack.c.l.b16 %v310
      %v382 = vunpack.c.l.b16 %v311
      %v383 = vpack.c.b16 %v360, %v359
      %v384 = vpack.c.b16 %v362, %v361
      %v385 = vpack.c.b16 %v364, %v363
      %v386 = vpack.c.b16 %v366, %v365
      %v387 = vpack.c.b16 %v368, %v367
      %v388 = vpack.c.b16 %v370, %v369
      %v389 = vpack.c.b16 %v372, %v371
      %v390 = vpack.c.b16 %v374, %v373
      %v391 = vpack.c.b16 %v376, %v375
      %v392 = vpack.c.b16 %v378, %v377
      %v393 = vpack.c.b16 %v380, %v379
      %v394 = vpack.c.b16 %v382, %v381
      %v423 = vunpack.c.l.b16 %v312
      %v424 = vunpack.c.l.b16 %v313
      %v425 = vunpack.c.l.b16 %v314
      %v426 = vunpack.c.l.b16 %v315
      %v427 = vunpack.c.l.b16 %v316
      %v428 = vunpack.c.l.b16 %v317
      %v429 = vunpack.c.l.b16 %v318
      %v430 = vunpack.c.l.b16 %v319
      %v431 = vunpack.c.l.b16 %v320
      %v432 = vunpack.c.l.b16 %v321
      %v433 = vunpack.c.l.b16 %v322
      %v434 = vunpack.c.l.b16 %v323
      %v435 = vunpack.c.l.b16 %v324
      %v436 = vunpack.c.l.b16 %v325
      %v437 = vunpack.c.l.b16 %v326
      %v438 = vunpack.c.l.b16 %v327
      %v439 = vpack.c.b16 %v424, %v423
      %v440 = vpack.c.b16 %v426, %v425
      %v441 = vpack.c.b16 %v428, %v427
      %v442 = vpack.c.b16 %v430, %v429
      %v443 = vpack.c.b16 %v432, %v431
      %v444 = vpack.c.b16 %v434, %v433
      %v445 = vpack.c.b16 %v436, %v435
      %v446 = vpack.c.b16 %v438, %v437
      %455 = vmatprep.subr.bf16.mxu0 0
      %456 = vmatpush1.bf16.msra.mxu0 %v439
      %457 = vmatprep.subr.bf16.mxu0 0
      %458 = vmatpush1.bf16.msra.mxu0 %v440
      %459 = vmatprep.subr.bf16.mxu0 0
      %460 = vmatpush1.bf16.msra.mxu0 %v441
      %461 = vmatprep.subr.bf16.mxu0 0
      %462 = vmatpush1.bf16.msra.mxu0 %v442
      %463 = vmatprep.subr.bf16.mxu0 0
      %464 = vmatpush1.bf16.msra.mxu0 %v443
      %465 = vmatprep.subr.bf16.mxu0 0
      %466 = vmatpush1.bf16.msra.mxu0 %v444
      %467 = vmatprep.subr.bf16.mxu0 0
      %468 = vmatpush1.bf16.msra.mxu0 %v445
      %469 = vmatprep.subr.bf16.mxu0 0
      %470 = vmatpush1.bf16.msra.mxu0 %v446
      %471 = vmatprep.subr.bf16.mxu0 0
      %472 = vmatpush1.bf16.msra.mxu0 0
      %473 = vmatprep.subr.bf16.mxu0 0
      %474 = vmatpush1.bf16.msra.mxu0 0
      %475 = vmatprep.subr.bf16.mxu0 0
      %476 = vmatpush1.bf16.msra.mxu0 0
      %477 = vmatprep.subr.bf16.mxu0 0
      %478 = vmatpush1.bf16.msra.mxu0 0
      %479 = vmatprep.subr.bf16.mxu0 0
      %480 = vmatpush1.bf16.msra.mxu0 0
      %481 = vmatprep.subr.bf16.mxu0 0
      %482 = vmatpush1.bf16.msra.mxu0 0
      %483 = vmatprep.subr.bf16.mxu0 0
      %484 = vmatpush1.bf16.msra.mxu0 0
      %485 = vmatprep.subr.bf16.mxu0 0
      %486 = vmatpush1.bf16.msra.mxu0 0
      %487 = vmatprep.mubr.bf16.mxu0 0
      %488 = vmatmul.mubr.bf16.gmra.mrb[0].mxu0 %v383
      %v489 = vpop.f32.mrb[0].mxu0
      %v490 = vadd.f32 %v333, %v489
      %v491 = vpop.f32.mrb[0].mxu0
      %v492 = vpop.f32.mrb[0].mxu0
      %v493 = vadd.f32 %v333, %v492
      %v494 = vpop.f32.mrb[0].mxu0
      %495 = vmatprep.mubr.bf16.mxu0 0
      %496 = vmatmul.mubr.bf16.gmra.mrb[0].mxu0 %v384
      %v497 = vpop.f32.mrb[0].mxu0
      %v498 = vadd.f32 %v333, %v497
      %v499 = vpop.f32.mrb[0].mxu0
      %v500 = vpop.f32.mrb[0].mxu0
      %v501 = vadd.f32 %v333, %v500
      %v502 = vpop.f32.mrb[0].mxu0
      %503 = vmatprep.mubr.bf16.mxu0 0
      %504 = vmatmul.mubr.bf16.gmra.mrb[0].mxu0 %v385
      %v505 = vpop.f32.mrb[0].mxu0
      %v506 = vadd.f32 %v333, %v505
      %v507 = vpop.f32.mrb[0].mxu0
      %v508 = vpop.f32.mrb[0].mxu0
      %v509 = vadd.f32 %v333, %v508
      %v510 = vpop.f32.mrb[0].mxu0
      %511 = vmatprep.mubr.bf16.mxu0 0
      %512 = vmatmul.mubr.bf16.gmra.mrb[0].mxu0 %v386
      %v513 = vpop.f32.mrb[0].mxu0
      %v514 = vadd.f32 %v333, %v513
      %v515 = vpop.f32.mrb[0].mxu0
      %v516 = vpop.f32.mrb[0].mxu0
      %v517 = vadd.f32 %v333, %v516
      %v518 = vpop.f32.mrb[0].mxu0
      %519 = vmatprep.mubr.bf16.mxu0 0
      %520 = vmatmul.mubr.bf16.gmra.mrb[0].mxu0 %v387
      %v521 = vpop.f32.mrb[0].mxu0
      %v522 = vadd.f32 %v333, %v521
      %v523 = vpop.f32.mrb[0].mxu0
      %v524 = vpop.f32.mrb[0].mxu0
      %v525 = vadd.f32 %v333, %v524
      %v526 = vpop.f32.mrb[0].mxu0
      %527 = vmatprep.mubr.bf16.mxu0 0
      %528 = vmatmul.mubr.bf16.gmra.mrb[0].mxu0 %v388
      %v529 = vpop.f32.mrb[0].mxu0
      %v530 = vadd.f32 %v333, %v529
      %v531 = vpop.f32.mrb[0].mxu0
      %v532 = vpop.f32.mrb[0].mxu0
      %v533 = vadd.f32 %v333, %v532
      %v534 = vpop.f32.mrb[0].mxu0
      %535 = vmatprep.mubr.bf16.mxu0 0
      %536 = vmatmul.mubr.bf16.gmra.mrb[0].mxu0 %v389
      %v537 = vpop.f32.mrb[0].mxu0
      %v538 = vadd.f32 %v333, %v537
      %v539 = vpop.f32.mrb[0].mxu0
      %v540 = vpop.f32.mrb[0].mxu0
      %v541 = vadd.f32 %v333, %v540
      %v542 = vpop.f32.mrb[0].mxu0
      %543 = vmatprep.mubr.bf16.mxu0 0
      %544 = vmatmul.mubr.bf16.gmra.mrb[0].mxu0 %v390
      %v545 = vpop.f32.mrb[0].mxu0
      %v546 = vadd.f32 %v333, %v545
      %v547 = vpop.f32.mrb[0].mxu0
      %v548 = vpop.f32.mrb[0].mxu0
      %v549 = vadd.f32 %v333, %v548
      %v550 = vpop.f32.mrb[0].mxu0
      %551 = vmatprep.mubr.bf16.mxu0 0
      %552 = vmatmul.mubr.bf16.gmra.mrb[0].mxu0 %v391
      %v553 = vpop.f32.mrb[0].mxu0
      %v554 = vadd.f32 %v333, %v553
      %v555 = vpop.f32.mrb[0].mxu0
      %v556 = vpop.f32.mrb[0].mxu0
      %v557 = vadd.f32 %v333, %v556
      %v558 = vpop.f32.mrb[0].mxu0
      %559 = vmatprep.mubr.bf16.mxu0 0
      %560 = vmatmul.mubr.bf16.gmra.mrb[0].mxu0 %v392
      %v561 = vpop.f32.mrb[0].mxu0
      %v562 = vadd.f32 %v333, %v561
      %v563 = vpop.f32.mrb[0].mxu0
      %v564 = vpop.f32.mrb[0].mxu0
      %v565 = vadd.f32 %v333, %v564
      %v566 = vpop.f32.mrb[0].mxu0
      %567 = vmatprep.mubr.bf16.mxu0 0
      %568 = vmatmul.mubr.bf16.gmra.mrb[0].mxu0 %v393
      %v569 = vpop.f32.mrb[0].mxu0
      %v570 = vadd.f32 %v333, %v569
      %v571 = vpop.f32.mrb[0].mxu0
      %v572 = vpop.f32.mrb[0].mxu0
      %v573 = vadd.f32 %v333, %v572
      %v574 = vpop.f32.mrb[0].mxu0
      %575 = vmatprep.mubr.bf16.mxu0 0
      %576 = vmatmul.mubr.bf16.gmra.mrb[0].mxu0 %v394
      %v577 = vpop.f32.mrb[0].mxu0
      %v578 = vadd.f32 %v333, %v577
      %v579 = vpop.f32.mrb[0].mxu0
      %v580 = vpop.f32.mrb[0].mxu0
      %v581 = vadd.f32 %v333, %v580
      %v582 = vpop.f32.mrb[0].mxu0
      %583 = vdwg.mxu0
      %584 = vst [vmem:[%s273] sm:$0xff] %v490
      %585 = vst [vmem:[%s273 + $0x8] sm:$0xff] %v493
      %586 = vst [vmem:[%s273 + $0x10] sm:$0xff] %v498
      %587 = vst [vmem:[%s273 + $0x18] sm:$0xff] %v501
      %588 = vst [vmem:[%s273 + $0x20] sm:$0xff] %v506
      %589 = vst [vmem:[%s273 + $0x28] sm:$0xff] %v509
      %590 = vst [vmem:[%s273 + $0x30] sm:$0xff] %v514
      %591 = vst [vmem:[%s273 + $0x38] sm:$0xff] %v517
      %592 = vst [vmem:[%s273 + $0x40] sm:$0xff] %v522
      %593 = vst [vmem:[%s273 + $0x48] sm:$0xff] %v525
      %594 = vst [vmem:[%s273 + $0x50] sm:$0xff] %v530
      %595 = vst [vmem:[%s273 + $0x58] sm:$0xff] %v533
      %596 = vst [vmem:[%s273 + $0x60] sm:$0xff] %v538
      %597 = vst [vmem:[%s273 + $0x68] sm:$0xff] %v541
      %598 = vst [vmem:[%s273 + $0x70] sm:$0xff] %v546
      %599 = vst [vmem:[%s273 + $0x78] sm:$0xff] %v549
      %600 = vst [vmem:[%s273 + $0x80] sm:$0xff] %v554
      %601 = vst [vmem:[%s273 + $0x88] sm:$0xff] %v557
      %602 = vst [vmem:[%s273 + $0x90] sm:$0xff] %v562
      %603 = vst [vmem:[%s273 + $0x98] sm:$0xff] %v565
      %604 = vst [vmem:[%s273 + $0xa0] sm:$0xff] %v570
      %605 = vst [vmem:[%s273 + $0xa8] sm:$0xff] %v573
      %606 = vst [vmem:[%s273 + $0xb0] sm:$0xff] %v578
      %607 = vst [vmem:[%s273 + $0xb8] sm:$0xff] %v581
      %v608 = vlaneseq
      %v609 = vshrl.u32 %v608, 7
      %v610 = vadd.s32 %v609, 8
      %v611 = vadd.s32 %v609, 16
      %v612 = vadd.s32 %v609, 24
      %v613 = vadd.s32 %v609, 32
      %v614 = vadd.s32 %v609, 40
      %v615 = vadd.s32 %v609, 48
      %v616 = vadd.s32 %v609, 56
      %v617 = vadd.s32 %v609, 64
      %v618 = vadd.s32 %v609, 72
      %v619 = vadd.s32 %v609, 80
      %v620 = vadd.s32 %v609, 88
      %v621 = vadd.s32 %v609, 96
      %v622 = vadd.s32 %v609, 104
      %v623 = vadd.s32 %v609, 112
      %v624 = vadd.s32 %v609, 120
      %v625 = vadd.s32 %v609, 128
      %v626 = vadd.s32 %v609, 136
      %v627 = vadd.s32 %v609, 144
      %v628 = vadd.s32 %v609, 152
      %v629 = vadd.s32 %v609, 160
      %v630 = vadd.s32 %v609, 168
      %v631 = vadd.s32 %v609, 176
      %v632 = vadd.s32 %v609, 184
      %s633 = smul.u32 %s22, 192
      %v634 = vstv %s633
      %v635 = vadd.s32 %v609, %v634
      %v636 = vadd.s32 %v610, %v634
      %v637 = vadd.s32 %v611, %v634
      %v638 = vadd.s32 %v612, %v634
      %v639 = vadd.s32 %v613, %v634
      %v640 = vadd.s32 %v614, %v634
      %v641 = vadd.s32 %v615, %v634
      %v642 = vadd.s32 %v616, %v634
      %v643 = vadd.s32 %v617, %v634
      %v644 = vadd.s32 %v618, %v634
      %v645 = vadd.s32 %v619, %v634
      %v646 = vadd.s32 %v620, %v634
      %v647 = vadd.s32 %v621, %v634
      %v648 = vadd.s32 %v622, %v634
      %v649 = vadd.s32 %v623, %v634
      %v650 = vadd.s32 %v624, %v634
      %v651 = vadd.s32 %v625, %v634
      %v652 = vadd.s32 %v626, %v634
      %v653 = vadd.s32 %v627, %v634
      %v654 = vadd.s32 %v628, %v634
      %v655 = vadd.s32 %v629, %v634
      %v656 = vadd.s32 %v630, %v634
      %v657 = vadd.s32 %v631, %v634
      %v658 = vadd.s32 %v632, %v634
      %vm659 = vcmp.lt.s32.totalorder %v635, 512
      %vm660 = vcmp.lt.s32.totalorder %v636, 512
      %vm661 = vcmp.lt.s32.totalorder %v637, 512
      %vm662 = vcmp.lt.s32.totalorder %v638, 512
      %vm663 = vcmp.lt.s32.totalorder %v639, 512
      %vm664 = vcmp.lt.s32.totalorder %v640, 512
      %vm665 = vcmp.lt.s32.totalorder %v641, 512
      %vm666 = vcmp.lt.s32.totalorder %v642, 512
      %vm667 = vcmp.lt.s32.totalorder %v643, 512
      %vm668 = vcmp.lt.s32.totalorder %v644, 512
      %vm669 = vcmp.lt.s32.totalorder %v645, 512
      %vm670 = vcmp.lt.s32.totalorder %v646, 512
      %vm671 = vcmp.lt.s32.totalorder %v647, 512
      %vm672 = vcmp.lt.s32.totalorder %v648, 512
      %vm673 = vcmp.lt.s32.totalorder %v649, 512
      %vm674 = vcmp.lt.s32.totalorder %v650, 512
      %vm675 = vcmp.lt.s32.totalorder %v651, 512
      %vm676 = vcmp.lt.s32.totalorder %v652, 512
      %vm677 = vcmp.lt.s32.totalorder %v653, 512
      %vm678 = vcmp.lt.s32.totalorder %v654, 512
      %vm679 = vcmp.lt.s32.totalorder %v655, 512
      %vm680 = vcmp.lt.s32.totalorder %v656, 512
      %vm681 = vcmp.lt.s32.totalorder %v657, 512
      %vm682 = vcmp.lt.s32.totalorder %v658, 512
      %v683 = vsel %vm659, 1, 0
      %v684 = vsel %vm660, 1, 0
      %v685 = vsel %vm661, 1, 0
      %v686 = vsel %vm662, 1, 0
      %v687 = vsel %vm663, 1, 0
      %v688 = vsel %vm664, 1, 0
      %v689 = vsel %vm665, 1, 0
      %v690 = vsel %vm666, 1, 0
      %v691 = vsel %vm667, 1, 0
      %v692 = vsel %vm668, 1, 0
      %v693 = vsel %vm669, 1, 0
      %v694 = vsel %vm670, 1, 0
      %v695 = vsel %vm671, 1, 0
      %v696 = vsel %vm672, 1, 0
      %v697 = vsel %vm673, 1, 0
      %v698 = vsel %vm674, 1, 0
      %v699 = vsel %vm675, 1, 0
      %v700 = vsel %vm676, 1, 0
      %v701 = vsel %vm677, 1, 0
      %v702 = vsel %vm678, 1, 0
      %v703 = vsel %vm679, 1, 0
      %v704 = vsel %vm680, 1, 0
      %v705 = vsel %vm681, 1, 0
      %v706 = vsel %vm682, 1, 0
      %vm707 = vcmp.eq.s32.totalorder %v683, 1
      %vm708 = vcmp.eq.s32.totalorder %v684, 1
      %vm709 = vcmp.eq.s32.totalorder %v685, 1
      %vm710 = vcmp.eq.s32.totalorder %v686, 1
      %vm711 = vcmp.eq.s32.totalorder %v687, 1
      %vm712 = vcmp.eq.s32.totalorder %v688, 1
      %vm713 = vcmp.eq.s32.totalorder %v689, 1
      %vm714 = vcmp.eq.s32.totalorder %v690, 1
      %vm715 = vcmp.eq.s32.totalorder %v691, 1
      %vm716 = vcmp.eq.s32.totalorder %v692, 1
      %vm717 = vcmp.eq.s32.totalorder %v693, 1
      %vm718 = vcmp.eq.s32.totalorder %v694, 1
      %vm719 = vcmp.eq.s32.totalorder %v695, 1
      %vm720 = vcmp.eq.s32.totalorder %v696, 1
      %vm721 = vcmp.eq.s32.totalorder %v697, 1
      %vm722 = vcmp.eq.s32.totalorder %v698, 1
      %vm723 = vcmp.eq.s32.totalorder %v699, 1
      %vm724 = vcmp.eq.s32.totalorder %v700, 1
      %vm725 = vcmp.eq.s32.totalorder %v701, 1
      %vm726 = vcmp.eq.s32.totalorder %v702, 1
      %vm727 = vcmp.eq.s32.totalorder %v703, 1
      %vm728 = vcmp.eq.s32.totalorder %v704, 1
      %vm729 = vcmp.eq.s32.totalorder %v705, 1
      %vm730 = vcmp.eq.s32.totalorder %v706, 1
      %v731 = vsel %vm707, %v490, 0.0
      %v732 = vsel %vm708, %v493, 0.0
      %v733 = vsel %vm709, %v498, 0.0
      %v734 = vsel %vm710, %v501, 0.0
      %v735 = vsel %vm711, %v506, 0.0
      %v736 = vsel %vm712, %v509, 0.0
      %v737 = vsel %vm713, %v514, 0.0
      %v738 = vsel %vm714, %v517, 0.0
      %v739 = vsel %vm715, %v522, 0.0
      %v740 = vsel %vm716, %v525, 0.0
      %v741 = vsel %vm717, %v530, 0.0
      %v742 = vsel %vm718, %v533, 0.0
      %v743 = vsel %vm719, %v538, 0.0
      %v744 = vsel %vm720, %v541, 0.0
      %v745 = vsel %vm721, %v546, 0.0
      %v746 = vsel %vm722, %v549, 0.0
      %v747 = vsel %vm723, %v554, 0.0
      %v748 = vsel %vm724, %v557, 0.0
      %v749 = vsel %vm725, %v562, 0.0
      %v750 = vsel %vm726, %v565, 0.0
      %v751 = vsel %vm727, %v570, 0.0
      %v752 = vsel %vm728, %v573, 0.0
      %v753 = vsel %vm729, %v578, 0.0
      %v754 = vsel %vm730, %v581, 0.0
      %v755 = vld [vmem:[%s277] sm:$0x1]
      %v756 = vadd.f32 %v731, %v732
      %v757 = vadd.f32 %v756, %v733
      %v758 = vadd.f32 %v757, %v734
      %v759 = vadd.f32 %v758, %v735
      %v760 = vadd.f32 %v759, %v736
      %v761 = vadd.f32 %v760, %v737
      %v762 = vadd.f32 %v761, %v738
      %v763 = vadd.f32 %v762, %v739
      %v764 = vadd.f32 %v763, %v740
      %v765 = vadd.f32 %v764, %v741
      %v766 = vadd.f32 %v765, %v742
      %v767 = vadd.f32 %v766, %v743
      %v768 = vadd.f32 %v767, %v744
      %v769 = vadd.f32 %v768, %v745
      %v770 = vadd.f32 %v769, %v746
      %v771 = vadd.f32 %v770, %v747
      %v772 = vadd.f32 %v771, %v748
      %v773 = vadd.f32 %v772, %v749
      %v774 = vadd.f32 %v773, %v750
      %v775 = vadd.f32 %v774, %v751
      %v776 = vadd.f32 %v775, %v752
      %v777 = vadd.f32 %v776, %v753
      %v778 = vadd.f32 %v777, %v754
      %v779 = vrot.slane %v778, 4
      %v780 = vadd.f32 %v778, %v779
      %v781 = vrot.slane %v780, 2
      %v782 = vadd.f32 %v780, %v781
      %v783 = vrot.slane %v782, 1
      %v784 = vadd.f32 %v782, %v783
      %v785 = vadd.f32 %v755, %v784
      %786 = vst [vmem:[%s277] sm:$0x1] %v785
      %v787 = vld [vmem:[%s280] sm:$0x1]
      %v788 = vmul.f32 %v731, %v490
      %v789 = vmul.f32 %v732, %v493
      %v790 = vmul.f32 %v733, %v498
      %v791 = vmul.f32 %v734, %v501
      %v792 = vmul.f32 %v735, %v506
      %v793 = vmul.f32 %v736, %v509
      %v794 = vmul.f32 %v737, %v514
      %v795 = vmul.f32 %v738, %v517
      %v796 = vmul.f32 %v739, %v522
      %v797 = vmul.f32 %v740, %v525
      %v798 = vmul.f32 %v741, %v530
      %v799 = vmul.f32 %v742, %v533
      %v800 = vmul.f32 %v743, %v538
      %v801 = vmul.f32 %v744, %v541
      %v802 = vmul.f32 %v745, %v546
      %v803 = vmul.f32 %v746, %v549
      %v804 = vmul.f32 %v747, %v554
      %v805 = vmul.f32 %v748, %v557
      %v806 = vmul.f32 %v749, %v562
      %v807 = vmul.f32 %v750, %v565
      %v808 = vmul.f32 %v751, %v570
      %v809 = vmul.f32 %v752, %v573
      %v810 = vmul.f32 %v753, %v578
      %v811 = vmul.f32 %v754, %v581
      %v812 = vadd.f32 %v788, %v789
      %v813 = vadd.f32 %v812, %v790
      %v814 = vadd.f32 %v813, %v791
      %v815 = vadd.f32 %v814, %v792
      %v816 = vadd.f32 %v815, %v793
      %v817 = vadd.f32 %v816, %v794
      %v818 = vadd.f32 %v817, %v795
      %v819 = vadd.f32 %v818, %v796
      %v820 = vadd.f32 %v819, %v797
      %v821 = vadd.f32 %v820, %v798
      %v822 = vadd.f32 %v821, %v799
      %v823 = vadd.f32 %v822, %v800
      %v824 = vadd.f32 %v823, %v801
      %v825 = vadd.f32 %v824, %v802
      %v826 = vadd.f32 %v825, %v803
      %v827 = vadd.f32 %v826, %v804
      %v828 = vadd.f32 %v827, %v805
      %v829 = vadd.f32 %v828, %v806
      %v830 = vadd.f32 %v829, %v807
      %v831 = vadd.f32 %v830, %v808
      %v832 = vadd.f32 %v831, %v809
      %v833 = vadd.f32 %v832, %v810
      %v834 = vadd.f32 %v833, %v811
      %v835 = vrot.slane %v834, 4
      %v836 = vadd.f32 %v834, %v835
      %v837 = vrot.slane %v836, 2
      %v838 = vadd.f32 %v836, %v837
      %v839 = vrot.slane %v838, 1
      %v840 = vadd.f32 %v838, %v839
      %v841 = vadd.f32 %v787, %v840
      %842 = vst [vmem:[%s280] sm:$0x1] %v841
      %s843 = smul.u32 24, %s22
      %p844 = scmp.lt.s32.totalorder %s21, 1
      %s845 = scalar_select %p844, %s21, 1
      %p846 = scmp.lt.s32.totalorder %s843, 71
      %s847 = scalar_select %p846, %s843, 71
      %s848 = smul.addr %s845, 72
      %s849 = sadd.s32 %s847, %s848
      %s850 = smul.addr %s849, 8
      %s851 = scalar_lea.vmem %s3, %s850
      %p852 = scmp.lt.s32.totalorder %s21, 1
      %s853 = scalar_select %p852, %s21, 1
      %s854 = scalar_lea.vmem %s4, %s853
      %p855 = scmp.lt.s32.totalorder %s21, 1
      %s856 = scalar_select %p855, %s21, 1
      %s857 = scalar_lea.vmem %s5, %s856
      // Predicated region
      $region37: #{deconv3d_pallas.2} parent=31 // pred_check
        %p858 = pneg %p119
      $region38: #{deconv3d_pallas.2} parent=31 // pred_check_branch
        %860 = sbr.rel (%p858) target = $region40
      $region39: #{deconv3d_pallas.2} parent=31 // pred_region
        %s861 = smul.u32 24, %s22
      $region40: #{deconv3d_pallas.2} parent=31 // pred_fallthru
        _
      // Predicated region
      $region41: #{deconv3d_pallas.2} parent=31 // pred_check
        %p862 = pneg %p145
      $region42: #{deconv3d_pallas.2} parent=31 // pred_check_branch
        %864 = sbr.rel (%p862) target = $region44
      $region43: #{deconv3d_pallas.2} parent=31 // pred_region
        _
      $region44: #{deconv3d_pallas.2} parent=31 // pred_fallthru
        _
      // Predicated region
      $region45: #{deconv3d_pallas.2} parent=31 // pred_check
        %p865 = pneg %p171
      $region46: #{deconv3d_pallas.2} parent=31 // pred_check_branch
        %867 = sbr.rel (%p865) target = $region48
      $region47: #{deconv3d_pallas.2} parent=31 // pred_region
        _
      $region48: #{deconv3d_pallas.2} parent=31 // pred_fallthru
        _
    $region32: #{deconv3d_pallas.2} parent=5 // pred_fallthru
      _
    %p868 = scmp.le.s32.totalorder 2, %s12
    // Predicated region
    $region49: #{deconv3d_pallas.2} parent=5 // pred_check
      %p869 = pneg %p868
    $region50: #{deconv3d_pallas.2} parent=5 // pred_check_branch
      %871 = sbr.rel (%p869) target = $region52
    $region51: #{deconv3d_pallas.2} parent=5 // pred_region
      %s872 = ssub.s32 %s12, 2
      // Predicated region
      $region53: #{deconv3d_pallas.2} parent=51 // pred_check
        %p873 = pneg %p125
      $region54: #{deconv3d_pallas.2} parent=51 // pred_check_branch
        %875 = sbr.rel (%p873) target = $region56
      $region55: #{deconv3d_pallas.2} parent=51 // pred_region
        %s876 = smul.u32 24, %s24
        %p877 = scmp.lt.s32.totalorder %s23, 1
        %s878 = scalar_select %p877, %s23, 1
        %p879 = scmp.lt.s32.totalorder %s876, 71
        %s880 = scalar_select %p879, %s876, 71
        %s881 = smul.addr %s878, 72
        %s882 = sadd.s32 %s880, %s881
        %s883 = smul.addr %s882, 8
        %s884 = scalar_lea.vmem %s3, %s883
      $region56: #{deconv3d_pallas.2} parent=51 // pred_fallthru
        _
      // Predicated region
      $region57: #{deconv3d_pallas.2} parent=51 // pred_check
        %p885 = pneg %p151
      $region58: #{deconv3d_pallas.2} parent=51 // pred_check_branch
        %887 = sbr.rel (%p885) target = $region60
      $region59: #{deconv3d_pallas.2} parent=51 // pred_region
        %p888 = scmp.lt.s32.totalorder %s23, 1
        %s889 = scalar_select %p888, %s23, 1
        %s890 = scalar_lea.vmem %s4, %s889
      $region60: #{deconv3d_pallas.2} parent=51 // pred_fallthru
        _
      // Predicated region
      $region61: #{deconv3d_pallas.2} parent=51 // pred_check
        %p891 = pneg %p177
      $region62: #{deconv3d_pallas.2} parent=51 // pred_check_branch
        %893 = sbr.rel (%p891) target = $region64
      $region63: #{deconv3d_pallas.2} parent=51 // pred_region
        %p894 = scmp.lt.s32.totalorder %s23, 1
        %s895 = scalar_select %p894, %s23, 1
        %s896 = scalar_lea.vmem %s5, %s895
      $region64: #{deconv3d_pallas.2} parent=51 // pred_fallthru
        _
    $region52: #{deconv3d_pallas.2} parent=5 // pred_fallthru
      _
  $region6: #{deconv3d_pallas.2} parent=0 // loop_footer
    %s16 = sadd.s32 1, %s12
  $region7: #{deconv3d_pallas.2} parent=0 // loop_footer_branch
    %11 = sbr.rel target = $region3
  $region8: #{deconv3d_pallas.2} parent=0 // loop_exit
    _

// kernel: deconv3d_pallas.3
$region0: #{deconv3d_pallas.3}
  #allocation0 [shape = 'u32[]', space=smem, size = 0x4, offset = 0x4, fixed_abs, tag = 'smem constant byte address 0x4 - core index']
  #allocation1 [shape = 'u32[144,128]{1,0:T(1,128)}', space=vmem, size = 0x12000, scoped, tag = 'internal scratch']
  %s0 = inlined_call_operand.vmem [shape: f32[2,576,128], index: 0, kind: input, shape index: {}]
  %s1 = inlined_call_operand.vmem [shape: f32[2,2,128], index: 1, kind: input, shape index: {}]
  %s2 = inlined_call_operand.vmem [shape: f32[2,576,128], index: 2, kind: input, shape index: {}, may-alias: {2,3}]
  %s3 = inlined_call_operand.vmem [shape: f32[2,576,128], index: 3, kind: output, shape index: {}, may-alias: {2,3}]
  %s4 = sld [smem:[#allocation0]]
  $region45: #{deconv3d_pallas.3} parent=0
    _
  %s6 = ssub.s32 1, %s4
  %s7 = scalar_select 0, %s6, %s4
  loop: start=0, step=1, limit=8
  $region2: #{deconv3d_pallas.3} parent=0 // loop_pre_header
    _
  $region3: #{deconv3d_pallas.3} parent=0 // loop_header
    %s9 = sphi 0, %s13
    %p10 = scmp.ge.s32.totalorder %s9, 8
    %s16 = sphi 0, %s28
    %s17 = sphi 0, %s24
    %s18 = sphi 0, %s16
    %s19 = sphi 0, %s17
    %s20 = sphi 0, %s18
    %s21 = sphi 0, %s19
    %s33 = sphi 0, %s35
    %s36 = sphi 0, %s33
    %s37 = sphi 0, %s36
    %s53 = sphi 0, %s37
    %s59 = sphi 0, %s61
    %s62 = sphi 0, %s59
    %s63 = sphi 0, %s62
    %s79 = sphi 0, %s63
    %s87 = sphi 0, %s89
    %s90 = sphi 0, %s87
    %s91 = sphi 0, %s90
    %s107 = sphi 0, %s91
    %s115 = sphi 0, %s117
    %s118 = sphi 0, %s115
    %s119 = sphi 0, %s118
    %s135 = sphi 0, %s119
  $region4: #{deconv3d_pallas.3} parent=0 // loop_header_branch
    %12 = sbr.rel (%p10) target = $region8
  $region5: #{deconv3d_pallas.3} parent=0 // loop_body
    %s14 = ssub.s32 %s9, 1
    %s15 = ssub.s32 %s9, 2
    %s22 = sadd.s32 1, %s17
    %p23 = scmp.ge.s32.totalorder %s22, 3
    %s24 = scalar_select %p23, 0, %s22
    %s25 = sadd.s32 1, %s16
    %s26 = scalar_select %p23, %s25, %s16
    %p27 = scmp.ge.s32.totalorder %s26, 2
    %s28 = scalar_select %p27, 0, %s26
    %s29 = ssub.s32 %s16, %s28
    %s30 = ssub.s32 %s17, %s24
    %s31 = sor.u32 %s29, %s30
    %p32 = scmp.eq.s32.totalorder %s31, 0
    %s34 = sadd.s32 %s33, 1
    %s35 = scalar_select %p32, %s33, %s34
    %p38 = pneg %p32
    %p39 = scmp.eq.s32.totalorder %s9, 5
    %p40 = por %p38, %p39
    %p41 = scmp.ne.s32.totalorder %s33, %s36
    %p42 = scmp.eq.s32.totalorder %s9, 0
    %p43 = por %p41, %p42
    %p44 = scmp.ne.s32.totalorder %s33, %s36
    %p45 = scmp.eq.s32.totalorder %s14, 5
    %p46 = por %p44, %p45
    %p47 = scmp.ne.s32.totalorder %s36, %s37
    %p48 = scmp.eq.s32.totalorder %s14, 0
    %p49 = por %p47, %p48
    %p50 = scmp.ne.s32.totalorder %s36, %s37
    %p51 = scmp.eq.s32.totalorder %s15, 5
    %p52 = por %p50, %p51
    %p54 = scmp.ne.s32.totalorder %s37, %s53
    %p55 = scmp.eq.s32.totalorder %s15, 0
    %p56 = por %p54, %p55
    %s57 = ssub.s32 %s16, %s28
    %p58 = scmp.eq.s32.totalorder %s57, 0
    %s60 = sadd.s32 %s59, 1
    %s61 = scalar_select %p58, %s59, %s60
    %p64 = pneg %p58
    %p65 = scmp.eq.s32.totalorder %s9, 5
    %p66 = por %p64, %p65
    %p67 = scmp.ne.s32.totalorder %s59, %s62
    %p68 = scmp.eq.s32.totalorder %s9, 0
    %p69 = por %p67, %p68
    %p70 = scmp.ne.s32.totalorder %s59, %s62
    %p71 = scmp.eq.s32.totalorder %s14, 5
    %p72 = por %p70, %p71
    %p73 = scmp.ne.s32.totalorder %s62, %s63
    %p74 = scmp.eq.s32.totalorder %s14, 0
    %p75 = por %p73, %p74
    %p76 = scmp.ne.s32.totalorder %s62, %s63
    %p77 = scmp.eq.s32.totalorder %s15, 5
    %p78 = por %p76, %p77
    %p80 = scmp.ne.s32.totalorder %s63, %s79
    %p81 = scmp.eq.s32.totalorder %s15, 0
    %p82 = por %p80, %p81
    %s83 = ssub.s32 %s16, %s28
    %s84 = ssub.s32 %s17, %s24
    %s85 = sor.u32 %s83, %s84
    %p86 = scmp.eq.s32.totalorder %s85, 0
    %s88 = sadd.s32 %s87, 1
    %s89 = scalar_select %p86, %s87, %s88
    %p92 = pneg %p86
    %p93 = scmp.eq.s32.totalorder %s9, 5
    %p94 = por %p92, %p93
    %p95 = scmp.ne.s32.totalorder %s87, %s90
    %p96 = scmp.eq.s32.totalorder %s9, 0
    %p97 = por %p95, %p96
    %p98 = scmp.ne.s32.totalorder %s87, %s90
    %p99 = scmp.eq.s32.totalorder %s14, 5
    %p100 = por %p98, %p99
    %p101 = scmp.ne.s32.totalorder %s90, %s91
    %p102 = scmp.eq.s32.totalorder %s14, 0
    %p103 = por %p101, %p102
    %p104 = scmp.ne.s32.totalorder %s90, %s91
    %p105 = scmp.eq.s32.totalorder %s15, 5
    %p106 = por %p104, %p105
    %p108 = scmp.ne.s32.totalorder %s91, %s107
    %p109 = scmp.eq.s32.totalorder %s15, 0
    %p110 = por %p108, %p109
    %s111 = ssub.s32 %s16, %s28
    %s112 = ssub.s32 %s17, %s24
    %s113 = sor.u32 %s111, %s112
    %p114 = scmp.eq.s32.totalorder %s113, 0
    %s116 = sadd.s32 %s115, 1
    %s117 = scalar_select %p114, %s115, %s116
    %p120 = pneg %p114
    %p121 = scmp.eq.s32.totalorder %s9, 5
    %p122 = por %p120, %p121
    %p123 = scmp.ne.s32.totalorder %s115, %s118
    %p124 = scmp.eq.s32.totalorder %s9, 0
    %p125 = por %p123, %p124
    %p126 = scmp.ne.s32.totalorder %s115, %s118
    %p127 = scmp.eq.s32.totalorder %s14, 5
    %p128 = por %p126, %p127
    %p129 = scmp.ne.s32.totalorder %s118, %s119
    %p130 = scmp.eq.s32.totalorder %s14, 0
    %p131 = por %p129, %p130
    %p132 = scmp.ne.s32.totalorder %s118, %s119
    %p133 = scmp.eq.s32.totalorder %s15, 5
    %p134 = por %p132, %p133
    %p136 = scmp.ne.s32.totalorder %s119, %s135
    %p137 = scmp.eq.s32.totalorder %s15, 0
    %p138 = por %p136, %p137
    %p139 = scmp.le.s32.totalorder 1, %s9
    %p140 = scmp.lt.s32.totalorder %s9, 7
    %p141 = pnand %p139, %p140
    %p142 = pneg %p141
    // Predicated region
    $region9: #{deconv3d_pallas.3} parent=5 // pred_check
      _
    $region10: #{deconv3d_pallas.3} parent=5 // pred_check_branch
      %144 = sbr.rel (%p141) target = $region12
    $region11: #{deconv3d_pallas.3} parent=5 // pred_region
      %s145 = ssub.s32 %s9, 1
    $region12: #{deconv3d_pallas.3} parent=5 // pred_fallthru
      _
    %p146 = scmp.lt.s32.totalorder %s9, 6
    // Predicated region
    $region13: #{deconv3d_pallas.3} parent=5 // pred_check
      %p147 = pneg %p146
    $region14: #{deconv3d_pallas.3} parent=5 // pred_check_branch
      %149 = sbr.rel (%p147) target = $region16
    $region15: #{deconv3d_pallas.3} parent=5 // pred_region
      // Predicated region
      $region17: #{deconv3d_pallas.3} parent=15 // pred_check
        %p150 = pneg %p43
      $region18: #{deconv3d_pallas.3} parent=15 // pred_check_branch
        %152 = sbr.rel (%p150) target = $region20
      $region19: #{deconv3d_pallas.3} parent=15 // pred_region
        %s153 = smul.u32 24, %s17
        %p154 = scmp.lt.s32.totalorder %s16, 1
        %s155 = scalar_select %p154, %s16, 1
        %p156 = scmp.lt.s32.totalorder %s153, 71
        %s157 = scalar_select %p156, %s153, 71
        %s158 = smul.addr %s155, 72
        %s159 = sadd.s32 %s157, %s158
        %s160 = smul.addr %s159, 8
        %s161 = scalar_lea.vmem %s0, %s160
        %s162 = smul.u32 24, %s17
      $region20: #{deconv3d_pallas.3} parent=15 // pred_fallthru
        _
      // Predicated region
      $region21: #{deconv3d_pallas.3} parent=15 // pred_check
        %p163 = pneg %p69
      $region22: #{deconv3d_pallas.3} parent=15 // pred_check_branch
        %165 = sbr.rel (%p163) target = $region24
      $region23: #{deconv3d_pallas.3} parent=15 // pred_region
        %p166 = scmp.lt.s32.totalorder %s16, 1
        %s167 = scalar_select %p166, %s16, 1
        %s168 = smul.addr %s167, 2
        %s169 = scalar_lea.vmem %s1, %s168
      $region24: #{deconv3d_pallas.3} parent=15 // pred_fallthru
        _
      // Predicated region
      $region25: #{deconv3d_pallas.3} parent=15 // pred_check
        %p170 = pneg %p97
      $region26: #{deconv3d_pallas.3} parent=15 // pred_check_branch
        %172 = sbr.rel (%p170) target = $region28
      $region27: #{deconv3d_pallas.3} parent=15 // pred_region
        %s173 = smul.u32 24, %s17
        %p174 = scmp.lt.s32.totalorder %s16, 1
        %s175 = scalar_select %p174, %s16, 1
        %p176 = scmp.lt.s32.totalorder %s173, 71
        %s177 = scalar_select %p176, %s173, 71
        %s178 = smul.addr %s175, 72
        %s179 = sadd.s32 %s177, %s178
        %s180 = smul.addr %s179, 8
        %s181 = scalar_lea.vmem %s2, %s180
        %s182 = smul.u32 24, %s17
      $region28: #{deconv3d_pallas.3} parent=15 // pred_fallthru
        _
    $region16: #{deconv3d_pallas.3} parent=5 // pred_fallthru
      _
    %p183 = scmp.le.s32.totalorder 1, %s9
    %p184 = scmp.lt.s32.totalorder %s9, 7
    %p185 = pnand %p183, %p184
    %p186 = pneg %p185
    // Predicated region
    $region29: #{deconv3d_pallas.3} parent=5 // pred_check
      _
    $region30: #{deconv3d_pallas.3} parent=5 // pred_check_branch
      %188 = sbr.rel (%p185) target = $region32
    $region31: #{deconv3d_pallas.3} parent=5 // pred_region
      %s189 = ssub.s32 %s9, 1
      %s190 = smul.u32 24, %s19
      %p191 = scmp.lt.s32.totalorder %s18, 1
      %s192 = scalar_select %p191, %s18, 1
      %p193 = scmp.lt.s32.totalorder %s190, 71
      %s194 = scalar_select %p193, %s190, 71
      %s195 = smul.addr %s192, 72
      %s196 = sadd.s32 %s194, %s195
      %s197 = smul.addr %s196, 8
      %s198 = scalar_lea.vmem %s0, %s197
      %p199 = pneg %p49
      %p200 = pneg %p46
      %p201 = scmp.lt.s32.totalorder %s18, 1
      %s202 = scalar_select %p201, %s18, 1
      %s203 = smul.addr %s202, 2
      %s204 = scalar_lea.vmem %s1, %s203
      %p205 = pneg %p75
      %p206 = pneg %p72
      %s207 = smul.u32 24, %s19
      %p208 = scmp.lt.s32.totalorder %s18, 1
      %s209 = scalar_select %p208, %s18, 1
      %p210 = scmp.lt.s32.totalorder %s207, 71
      %s211 = scalar_select %p210, %s207, 71
      %s212 = smul.addr %s209, 72
      %s213 = sadd.s32 %s211, %s212
      %s214 = smul.addr %s213, 8
      %s215 = scalar_lea.vmem %s2, %s214
      %p216 = pneg %p103
      %p217 = pneg %p100
      %p218 = pneg %p131
      %p219 = pneg %p128
      %s220 = smul.u32 24, %s19
      %p221 = scmp.lt.s32.totalorder %s18, 1
      %s222 = scalar_select %p221, %s18, 1
      %p223 = scmp.lt.s32.totalorder %s220, 71
      %s224 = scalar_select %p223, %s220, 71
      %s225 = smul.addr %s222, 72
      %s226 = sadd.s32 %s224, %s225
      %s227 = smul.addr %s226, 8
      %s228 = scalar_lea.vmem %s3, %s227
      %s229 = smul.u32 24, %s19
      %p230 = scmp.lt.s32.totalorder %s18, 1
      %s231 = scalar_select %p230, %s18, 1
      %p232 = scmp.lt.s32.totalorder %s229, 71
      %s233 = scalar_select %p232, %s229, 71
      %s234 = smul.addr %s231, 72
      %s235 = sadd.s32 %s233, %s234
      %s236 = smul.addr %s235, 8
      %s237 = scalar_lea.vmem %s0, %s236
      %s238 = smul.u32 24, %s19
      %p239 = scmp.lt.s32.totalorder %s18, 1
      %s240 = scalar_select %p239, %s18, 1
      %s241 = smul.addr %s240, 2
      %s242 = scalar_lea.vmem %s1, %s241
      %s243 = smul.u32 24, %s19
      %p244 = scmp.lt.s32.totalorder %s18, 1
      %s245 = scalar_select %p244, %s18, 1
      %p246 = scmp.lt.s32.totalorder %s243, 71
      %s247 = scalar_select %p246, %s243, 71
      %s248 = smul.addr %s245, 72
      %s249 = sadd.s32 %s247, %s248
      %s250 = smul.addr %s249, 8
      %s251 = scalar_lea.vmem %s2, %s250
      %s252 = smul.u32 24, %s19
      %s253 = smul.u32 24, %s19
      %p254 = scmp.lt.s32.totalorder %s18, 1
      %s255 = scalar_select %p254, %s18, 1
      %p256 = scmp.lt.s32.totalorder %s253, 71
      %s257 = scalar_select %p256, %s253, 71
      %s258 = smul.addr %s255, 72
      %s259 = sadd.s32 %s257, %s258
      %s260 = smul.addr %s259, 8
      %s261 = scalar_lea.vmem %s3, %s260
      %s262 = smul.u32 24, %s19
      %v263 = vld [vmem:[%s237] sm:$0xff]
      %v264 = vld [vmem:[%s237 + $0x8] sm:$0xff]
      %v265 = vld [vmem:[%s237 + $0x10] sm:$0xff]
      %v266 = vld [vmem:[%s237 + $0x18] sm:$0xff]
      %v267 = vld [vmem:[%s237 + $0x20] sm:$0xff]
      %v268 = vld [vmem:[%s237 + $0x28] sm:$0xff]
      %v269 = vld [vmem:[%s237 + $0x30] sm:$0xff]
      %v270 = vld [vmem:[%s237 + $0x38] sm:$0xff]
      %v271 = vld [vmem:[%s237 + $0x40] sm:$0xff]
      %v272 = vld [vmem:[%s237 + $0x48] sm:$0xff]
      %v273 = vld [vmem:[%s237 + $0x50] sm:$0xff]
      %v274 = vld [vmem:[%s237 + $0x58] sm:$0xff]
      %v275 = vld [vmem:[%s237 + $0x60] sm:$0xff]
      %v276 = vld [vmem:[%s237 + $0x68] sm:$0xff]
      %v277 = vld [vmem:[%s237 + $0x70] sm:$0xff]
      %v278 = vld [vmem:[%s237 + $0x78] sm:$0xff]
      %v279 = vld [vmem:[%s237 + $0x80] sm:$0xff]
      %v280 = vld [vmem:[%s237 + $0x88] sm:$0xff]
      %v281 = vld [vmem:[%s237 + $0x90] sm:$0xff]
      %v282 = vld [vmem:[%s237 + $0x98] sm:$0xff]
      %v283 = vld [vmem:[%s237 + $0xa0] sm:$0xff]
      %v284 = vld [vmem:[%s237 + $0xa8] sm:$0xff]
      %v285 = vld [vmem:[%s237 + $0xb0] sm:$0xff]
      %v286 = vld [vmem:[%s237 + $0xb8] sm:$0xff]
      %v287 = vld [vmem:[%s242] sm:$0x3]
      %v288 = vlaneseq
      %v289 = vshrl.u32 %v288, 7
      %v290 = vsub.s32 0, %v289
      %v291 = vrot.slane %v287, %v290
      %v292 = vmul.f32 %v263, %v291
      %v293 = vmul.f32 %v264, %v291
      %v294 = vmul.f32 %v265, %v291
      %v295 = vmul.f32 %v266, %v291
      %v296 = vmul.f32 %v267, %v291
      %v297 = vmul.f32 %v268, %v291
      %v298 = vmul.f32 %v269, %v291
      %v299 = vmul.f32 %v270, %v291
      %v300 = vmul.f32 %v271, %v291
      %v301 = vmul.f32 %v272, %v291
      %v302 = vmul.f32 %v273, %v291
      %v303 = vmul.f32 %v274, %v291
      %v304 = vmul.f32 %v275, %v291
      %v305 = vmul.f32 %v276, %v291
      %v306 = vmul.f32 %v277, %v291
      %v307 = vmul.f32 %v278, %v291
      %v308 = vmul.f32 %v279, %v291
      %v309 = vmul.f32 %v280, %v291
      %v310 = vmul.f32 %v281, %v291
      %v311 = vmul.f32 %v282, %v291
      %v312 = vmul.f32 %v283, %v291
      %v313 = vmul.f32 %v284, %v291
      %v314 = vmul.f32 %v285, %v291
      %v315 = vmul.f32 %v286, %v291
      %v316 = vlaneseq
      %v317 = vshrl.u32 %v316, 7
      %v318 = vsub.s32 1, %v317
      %v319 = vrot.slane %v287, %v318
      %v320 = vadd.f32 %v292, %v319
      %v321 = vadd.f32 %v293, %v319
      %v322 = vadd.f32 %v294, %v319
      %v323 = vadd.f32 %v295, %v319
      %v324 = vadd.f32 %v296, %v319
      %v325 = vadd.f32 %v297, %v319
      %v326 = vadd.f32 %v298, %v319
      %v327 = vadd.f32 %v299, %v319
      %v328 = vadd.f32 %v300, %v319
      %v329 = vadd.f32 %v301, %v319
      %v330 = vadd.f32 %v302, %v319
      %v331 = vadd.f32 %v303, %v319
      %v332 = vadd.f32 %v304, %v319
      %v333 = vadd.f32 %v305, %v319
      %v334 = vadd.f32 %v306, %v319
      %v335 = vadd.f32 %v307, %v319
      %v336 = vadd.f32 %v308, %v319
      %v337 = vadd.f32 %v309, %v319
      %v338 = vadd.f32 %v310, %v319
      %v339 = vadd.f32 %v311, %v319
      %v340 = vadd.f32 %v312, %v319
      %v341 = vadd.f32 %v313, %v319
      %v342 = vadd.f32 %v314, %v319
      %v343 = vadd.f32 %v315, %v319
      %v344 = vld [vmem:[%s251] sm:$0xff]
      %v345 = vld [vmem:[%s251 + $0x8] sm:$0xff]
      %v346 = vld [vmem:[%s251 + $0x10] sm:$0xff]
      %v347 = vld [vmem:[%s251 + $0x18] sm:$0xff]
      %v348 = vld [vmem:[%s251 + $0x20] sm:$0xff]
      %v349 = vld [vmem:[%s251 + $0x28] sm:$0xff]
      %v350 = vld [vmem:[%s251 + $0x30] sm:$0xff]
      %v351 = vld [vmem:[%s251 + $0x38] sm:$0xff]
      %v352 = vld [vmem:[%s251 + $0x40] sm:$0xff]
      %v353 = vld [vmem:[%s251 + $0x48] sm:$0xff]
      %v354 = vld [vmem:[%s251 + $0x50] sm:$0xff]
      %v355 = vld [vmem:[%s251 + $0x58] sm:$0xff]
      %v356 = vld [vmem:[%s251 + $0x60] sm:$0xff]
      %v357 = vld [vmem:[%s251 + $0x68] sm:$0xff]
      %v358 = vld [vmem:[%s251 + $0x70] sm:$0xff]
      %v359 = vld [vmem:[%s251 + $0x78] sm:$0xff]
      %v360 = vld [vmem:[%s251 + $0x80] sm:$0xff]
      %v361 = vld [vmem:[%s251 + $0x88] sm:$0xff]
      %v362 = vld [vmem:[%s251 + $0x90] sm:$0xff]
      %v363 = vld [vmem:[%s251 + $0x98] sm:$0xff]
      %v364 = vld [vmem:[%s251 + $0xa0] sm:$0xff]
      %v365 = vld [vmem:[%s251 + $0xa8] sm:$0xff]
      %v366 = vld [vmem:[%s251 + $0xb0] sm:$0xff]
      %v367 = vld [vmem:[%s251 + $0xb8] sm:$0xff]
      %v368 = vadd.f32 %v320, %v344
      %v369 = vadd.f32 %v321, %v345
      %v370 = vadd.f32 %v322, %v346
      %v371 = vadd.f32 %v323, %v347
      %v372 = vadd.f32 %v324, %v348
      %v373 = vadd.f32 %v325, %v349
      %v374 = vadd.f32 %v326, %v350
      %v375 = vadd.f32 %v327, %v351
      %v376 = vadd.f32 %v328, %v352
      %v377 = vadd.f32 %v329, %v353
      %v378 = vadd.f32 %v330, %v354
      %v379 = vadd.f32 %v331, %v355
      %v380 = vadd.f32 %v332, %v356
      %v381 = vadd.f32 %v333, %v357
      %v382 = vadd.f32 %v334, %v358
      %v383 = vadd.f32 %v335, %v359
      %v384 = vadd.f32 %v336, %v360
      %v385 = vadd.f32 %v337, %v361
      %v386 = vadd.f32 %v338, %v362
      %v387 = vadd.f32 %v339, %v363
      %v388 = vadd.f32 %v340, %v364
      %v389 = vadd.f32 %v341, %v365
      %v390 = vadd.f32 %v342, %v366
      %v391 = vadd.f32 %v343, %v367
      %v392 = vmax.f32 %v368, 0.0
      %v393 = vmax.f32 %v369, 0.0
      %v394 = vmax.f32 %v370, 0.0
      %v395 = vmax.f32 %v371, 0.0
      %v396 = vmax.f32 %v372, 0.0
      %v397 = vmax.f32 %v373, 0.0
      %v398 = vmax.f32 %v374, 0.0
      %v399 = vmax.f32 %v375, 0.0
      %v400 = vmax.f32 %v376, 0.0
      %v401 = vmax.f32 %v377, 0.0
      %v402 = vmax.f32 %v378, 0.0
      %v403 = vmax.f32 %v379, 0.0
      %v404 = vmax.f32 %v380, 0.0
      %v405 = vmax.f32 %v381, 0.0
      %v406 = vmax.f32 %v382, 0.0
      %v407 = vmax.f32 %v383, 0.0
      %v408 = vmax.f32 %v384, 0.0
      %v409 = vmax.f32 %v385, 0.0
      %v410 = vmax.f32 %v386, 0.0
      %v411 = vmax.f32 %v387, 0.0
      %v412 = vmax.f32 %v388, 0.0
      %v413 = vmax.f32 %v389, 0.0
      %v414 = vmax.f32 %v390, 0.0
      %v415 = vmax.f32 %v391, 0.0
      %416 = vst [vmem:[%s261] sm:$0xff] %v392
      %417 = vst [vmem:[%s261 + $0x8] sm:$0xff] %v393
      %418 = vst [vmem:[%s261 + $0x10] sm:$0xff] %v394
      %419 = vst [vmem:[%s261 + $0x18] sm:$0xff] %v395
      %420 = vst [vmem:[%s261 + $0x20] sm:$0xff] %v396
      %421 = vst [vmem:[%s261 + $0x28] sm:$0xff] %v397
      %422 = vst [vmem:[%s261 + $0x30] sm:$0xff] %v398
      %423 = vst [vmem:[%s261 + $0x38] sm:$0xff] %v399
      %424 = vst [vmem:[%s261 + $0x40] sm:$0xff] %v400
      %425 = vst [vmem:[%s261 + $0x48] sm:$0xff] %v401
      %426 = vst [vmem:[%s261 + $0x50] sm:$0xff] %v402
      %427 = vst [vmem:[%s261 + $0x58] sm:$0xff] %v403
      %428 = vst [vmem:[%s261 + $0x60] sm:$0xff] %v404
      %429 = vst [vmem:[%s261 + $0x68] sm:$0xff] %v405
      %430 = vst [vmem:[%s261 + $0x70] sm:$0xff] %v406
      %431 = vst [vmem:[%s261 + $0x78] sm:$0xff] %v407
      %432 = vst [vmem:[%s261 + $0x80] sm:$0xff] %v408
      %433 = vst [vmem:[%s261 + $0x88] sm:$0xff] %v409
      %434 = vst [vmem:[%s261 + $0x90] sm:$0xff] %v410
      %435 = vst [vmem:[%s261 + $0x98] sm:$0xff] %v411
      %436 = vst [vmem:[%s261 + $0xa0] sm:$0xff] %v412
      %437 = vst [vmem:[%s261 + $0xa8] sm:$0xff] %v413
      %438 = vst [vmem:[%s261 + $0xb0] sm:$0xff] %v414
      %439 = vst [vmem:[%s261 + $0xb8] sm:$0xff] %v415
      %s440 = smul.u32 24, %s19
      %p441 = scmp.lt.s32.totalorder %s18, 1
      %s442 = scalar_select %p441, %s18, 1
      %p443 = scmp.lt.s32.totalorder %s440, 71
      %s444 = scalar_select %p443, %s440, 71
      %s445 = smul.addr %s442, 72
      %s446 = sadd.s32 %s444, %s445
      %s447 = smul.addr %s446, 8
      %s448 = scalar_lea.vmem %s3, %s447
      // Predicated region
      $region33: #{deconv3d_pallas.3} parent=31 // pred_check
        %p449 = pneg %p128
      $region34: #{deconv3d_pallas.3} parent=31 // pred_check_branch
        %451 = sbr.rel (%p449) target = $region36
      $region35: #{deconv3d_pallas.3} parent=31 // pred_region
        %s452 = smul.u32 24, %s19
      $region36: #{deconv3d_pallas.3} parent=31 // pred_fallthru
        _
    $region32: #{deconv3d_pallas.3} parent=5 // pred_fallthru
      _
    %p453 = scmp.le.s32.totalorder 2, %s9
    // Predicated region
    $region37: #{deconv3d_pallas.3} parent=5 // pred_check
      %p454 = pneg %p453
    $region38: #{deconv3d_pallas.3} parent=5 // pred_check_branch
      %456 = sbr.rel (%p454) target = $region40
    $region39: #{deconv3d_pallas.3} parent=5 // pred_region
      %s457 = ssub.s32 %s9, 2
      // Predicated region
      $region41: #{deconv3d_pallas.3} parent=39 // pred_check
        %p458 = pneg %p134
      $region42: #{deconv3d_pallas.3} parent=39 // pred_check_branch
        %460 = sbr.rel (%p458) target = $region44
      $region43: #{deconv3d_pallas.3} parent=39 // pred_region
        %s461 = smul.u32 24, %s21
        %p462 = scmp.lt.s32.totalorder %s20, 1
        %s463 = scalar_select %p462, %s20, 1
        %p464 = scmp.lt.s32.totalorder %s461, 71
        %s465 = scalar_select %p464, %s461, 71
        %s466 = smul.addr %s463, 72
        %s467 = sadd.s32 %s465, %s466
        %s468 = smul.addr %s467, 8
        %s469 = scalar_lea.vmem %s3, %s468
      $region44: #{deconv3d_pallas.3} parent=39 // pred_fallthru
        _
    $region40: #{deconv3d_pallas.3} parent=5 // pred_fallthru
      _
  $region6: #{deconv3d_pallas.3} parent=0 // loop_footer
    %s13 = sadd.s32 1, %s9
  $region7: #{deconv3d_pallas.3} parent=0 // loop_footer_branch
    %8 = sbr.rel target = $region3
  $region8: #{deconv3d_pallas.3} parent=0 // loop_exit
    _

</llo_original>
